<compile_context>
chip_gen: v6e
topology: v6e:2x2x1
jax: 0.10.0
libtpu: 0.0.40
codegen_flags: <defaults>
</compile_context>

<pallas_src>
import jax
import jax.numpy as jnp
from jax.experimental import pallas as pl
from jax.experimental.pallas import tpu as pltpu

_K = 5  # conv kernel size for both convs


# ----------------------------- fused Pallas kernel -----------------------------

def net_kernel(x_ref, r1_ref, r2_ref, b1_ref, b2_ref, wfc_ref, bfc_ref,
               o_ref, a1_ref):
    """Forward pass for one tile of Bt images (grid axis = batch tiles).

    x_ref  : (28, Bt, 28)  f32   images, laid out (row, image, col)
    r1_ref : (140, 256)    bf16  conv1 RHS; dj=0/1 halves, each lane-padded to 128
    r2_ref : (640, 256)    bf16  conv2 RHS; 5 x 128-row chunks, dj halves padded
    b1_ref : (1, 128)      f32   conv1 bias tiled over pw  (lanes 120.. = 0)
    b2_ref : (1, 128)      f32   conv2 bias tiled over ow  (lanes  80.. = 0)
    wfc_ref: (512, 10)     bf16  fc weight in (oh, ow, c) order, 128 rows per oh
    bfc_ref: (1, 10)       f32
    o_ref  : (Bt, 10)      f32   log-softmax output
    a1_ref : (12, Bt, 128) f32   VMEM scratch: block-1 activation, lanes = pw*10 + c
    """
    bt = x_ref.shape[1]

    def conv_pool_relu(src_ref, p_out, r_ref, b_ref):
        # relu(maxpool2x2(conv(x) + b)): one MXU matmul per pool-row offset di against
        # the dj-fused 256-lane RHS; pool = elementwise max over di + aligned lane-half
        # max over dj.  Bias is per-channel, so max(conv) + b == max(conv + b).
        def lhs(di):
            # K stride-2 spatial slabs (leading-dim slices -> no sublane shuffles),
            # each collapsed (free: Bt % 8 == 0) and lane-concatenated into the
            # matmul LHS, then cast to bf16 for the MXU.
            chunks = [src_ref[pl.ds(di + ki, p_out, 2), :, :].reshape(p_out * bt, -1)
                      for ki in range(_K)]
            return jnp.concatenate(chunks, axis=-1).astype(jnp.bfloat16)

        y = jnp.maximum(
            jnp.dot(lhs(0), r_ref[...], preferred_element_type=jnp.float32),
            jnp.dot(lhs(1), r_ref[...], preferred_element_type=jnp.float32))
        y = jnp.maximum(y[:, :128], y[:, 128:])            # pool over dj (128-aligned)
        return jnp.maximum(y + b_ref[...], 0.0)            # bias + relu, f32

    # block 1: (28, Bt, 28) -> (12, Bt, 128); pad lanes are exactly 0 (zero RHS cols +
    # zero bias pad + relu), which also keeps conv2's pad-lane contraction rows inert.
    a1_ref[...] = conv_pool_relu(x_ref, 12, r1_ref, b1_ref).reshape(12, bt, 128)
    # block 2: (12, Bt, 128) -> (4, Bt, 128), lanes = ow*20 + c (lanes 80.. = 0)
    a2 = conv_pool_relu(a1_ref, 4, r2_ref, b2_ref).reshape(4, bt, 128)

    # fc + log_softmax: flatten = free 128-aligned lane concat of the 4 oh slabs.
    fc_in = jnp.concatenate([a2[oh] for oh in range(4)], axis=-1)       # (Bt, 512)
    z = jnp.dot(fc_in.astype(jnp.bfloat16), wfc_ref[...],
                preferred_element_type=jnp.float32) + bfc_ref[...]      # (Bt, 10)
    m = jnp.max(z, axis=-1, keepdims=True)
    s = jnp.sum(jnp.exp(z - m), axis=-1, keepdims=True)
    o_ref[...] = z - m - jnp.log(s)


# ----------------------------- weight lowering (one-time, pure XLA) -----------------------------

def _conv_pool_rhs(W, dj, w_in, p_out):
    """Lowered conv(+pool column offset dj) weight matrix (K*W_in*Cin, P*Cout).

    Rows: ki*(W_in*Cin) + w*Cin + ci ; cols: pw*Cout + co ; value W[co,ci,ki,w-2pw-dj]
    (zero when the horizontal tap is out of range), so LHS_di @ RHS_dj gives the
    un-pooled conv output at spatial position (2p+di, 2pw+dj).
    """
    c_out, c_in, k, _ = W.shape
    w = jnp.arange(w_in)[:, None]                  # (W_in, 1)
    pw = jnp.arange(p_out)[None, :]                # (1, P)
    kj = w - 2 * pw - dj                           # (W_in, P)
    valid = (kj >= 0) & (kj < k)
    kj_c = jnp.clip(kj, 0, k - 1)
    wt = jnp.transpose(W.astype(jnp.float32), (2, 1, 0, 3))    # (K, Cin, Cout, Kj)
    g = wt[:, :, :, kj_c]                          # (K, Cin, Cout, W_in, P)
    g = jnp.where(valid[None, None, None], g, 0.0)
    g = jnp.transpose(g, (0, 3, 1, 4, 2))          # (K, W_in, Cin, P, Cout)
    return g.reshape(k * w_in * c_in, p_out * c_out)


def _fused_conv_rhs(W, w_in, p_out, chunk):
    """dj-fused, lane-padded RHS of shape (K*chunk, 256).

    Per-ki row chunks are padded to `chunk` rows (zero rows for activation pad lanes);
    the dj=0 / dj=1 column blocks are each zero-padded to 128 lanes, so the kernel's
    dj pool-max is a whole lane-half max and padded output lanes stay exactly zero.
    """
    c_out, c_in, k, _ = W.shape
    halves = []
    for dj in (0, 1):
        r = _conv_pool_rhs(W, dj, w_in, p_out)                # (k*w_in*c_in, p_out*c_out)
        if chunk != w_in * c_in:
            r = r.reshape(k, w_in * c_in, p_out * c_out)
            r = jnp.pad(r, ((0, 0), (0, chunk - w_in * c_in), (0, 0)))
            r = r.reshape(k * chunk, p_out * c_out)
        halves.append(jnp.pad(r, ((0, 0), (0, 128 - p_out * c_out))))
    return jnp.concatenate(halves, axis=1)                    # (k*chunk, 256)


def prepare_params(params):
    """One-time transform of the PyTorch-layout parameters into kernel operands."""
    W1, b1, W2, b2, Wfc, bfc = params
    r1 = _fused_conv_rhs(W1, w_in=28, p_out=12, chunk=28).astype(jnp.bfloat16)   # (140, 256)
    r2 = _fused_conv_rhs(W2, w_in=12, p_out=4, chunk=128).astype(jnp.bfloat16)   # (640, 256)
    b1r = jnp.pad(jnp.tile(b1.astype(jnp.float32), 12), (0, 8))[None, :]         # (1, 128)
    b2r = jnp.pad(jnp.tile(b2.astype(jnp.float32), 4), (0, 48))[None, :]         # (1, 128)
    # Wfc is (10, 320) over the torch flatten order c*16 + oh*4 + ow; permute its
    # columns once to the kernel's (oh, ow, c) order, lane-padding each oh block to 128.
    wfc = jnp.transpose(Wfc.astype(jnp.float32).reshape(10, 20, 4, 4), (2, 3, 1, 0))
    wfc = jnp.pad(wfc.reshape(4, 80, 10), ((0, 0), (0, 48), (0, 0)))
    wfc = wfc.reshape(512, 10).astype(jnp.bfloat16)
    bfcr = bfc.astype(jnp.float32)[None, :]                                      # (1, 10)
    return r1, r2, b1r, b2r, wfc, bfcr


# ----------------------------- forward pass -----------------------------

def _round_up(n, m):
    return (n + m - 1) // m * m


def net_forward(x, prep, *, bt=64):
    """Batched forward.  bt = images per grid step (multiple of 8; sweep 64-256 and
    raise vmem_limit_bytes if pushing bt high on v5e/v7x)."""
    r1, r2, b1r, b2r, wfc, bfcr = prep
    B = x.shape[0]
    bt = _round_up(max(8, min(bt, _round_up(B, 8))), 8)
    Bp = _round_up(B, bt)

    x3 = x.astype(jnp.float32).reshape(B, 28, 28)          # matches torch reshape + cast
    if Bp != B:
        x3 = jnp.pad(x3, ((0, Bp - B), (0, 0), (0, 0)))
    xk = jnp.transpose(x3, (1, 0, 2))                      # (28, Bp, 28): row, image, col

    const = lambda i: (0, 0)
    out = pl.pallas_call(
        net_kernel,
        out_shape=jax.ShapeDtypeStruct((Bp, 10), jnp.float32),
        grid=(Bp // bt,),
        in_specs=[
            pl.BlockSpec((28, bt, 28), lambda i: (0, i, 0)),   # batch tile of images
            pl.BlockSpec((140, 256), const),                   # conv1 fused RHS (bf16)
            pl.BlockSpec((640, 256), const),                   # conv2 fused RHS (bf16)
            pl.BlockSpec((1, 128), const),                     # b1 tiled + padded
            pl.BlockSpec((1, 128), const),                     # b2 tiled + padded
            pl.BlockSpec((512, 10), const),                    # permuted fc weight
            pl.BlockSpec((1, 10), const),                      # fc bias
        ],
        out_specs=pl.BlockSpec((bt, 10), lambda i: (i, 0)),
        scratch_shapes=[pltpu.VMEM((12, bt, 128), jnp.float32)],   # block-1 activation
        compiler_params=pltpu.CompilerParams(
            dimension_semantics=("parallel",)),                # megacore batch split
    )(xk, r1, r2, b1r, b2r, wfc, bfcr)
    return out[:B]


# ----------------------------- init & reference -----------------------------

def init_params(key):
    """Deterministic init mimicking PyTorch's default U(-1/sqrt(fan_in), +1/sqrt(fan_in))."""
    ks = jax.random.split(key, 6)

    def u(k, shape, fan_in):
        bound = 1.0 / (fan_in ** 0.5)
        return jax.random.uniform(k, shape, jnp.float32, -bound, bound)

    W1 = u(ks[0], (10, 1, 5, 5), 1 * 5 * 5)
    b1 = u(ks[1], (10,), 1 * 5 * 5)
    W2 = u(ks[2], (20, 10, 5, 5), 10 * 5 * 5)
    b2 = u(ks[3], (20,), 10 * 5 * 5)
    Wfc = u(ks[4], (10, 320), 320)
    bfc = u(ks[5], (10,), 320)
    return W1, b1, W2, b2, Wfc, bfc


def net_reference(x, params):
    """Pure-JAX reference of the PyTorch forward (for correctness checking)."""
    W1, b1, W2, b2, Wfc, bfc = params
    B = x.shape[0]
    hi = jax.lax.Precision.HIGHEST
    a = x.astype(jnp.float32).reshape(B, 1, 28, 28)

    def block(a, W, b):
        y = jax.lax.conv_general_dilated(
            a, W, (1, 1), "VALID",
            dimension_numbers=("NCHW", "OIHW", "NCHW"), precision=hi)
        y = y + b[None, :, None, None]
        y = jax.lax.reduce_window(y, -jnp.inf, jax.lax.max,
                                  (1, 1, 2, 2), (1, 1, 2, 2), "VALID")
        return jax.nn.relu(y)

    a = block(block(a, W1, b1), W2, b2)
    z = jnp.dot(a.reshape(B, -1), Wfc.T, precision=hi) + bfc
    return jax.nn.log_softmax(z, axis=-1)


if __name__ == "__main__":
    key = jax.random.PRNGKey(0)
    kx, kp = jax.random.split(key)
    params = init_params(kp)
    prep = prepare_params(params)                        # one-time weight lowering

    fwd = jax.jit(net_forward, static_argnames=("bt",))

    # small batch (2 images, padded to one 8-image tile)
    x = jax.random.normal(kx, (2, 784), jnp.float32)
    out = jax.block_until_ready(fwd(x, prep, bt=64))
    assert out.shape == (2, 10) and out.dtype == jnp.float32
    # log_softmax rows should logsumexp to ~0
    assert bool(jnp.all(jnp.abs(jax.nn.logsumexp(out, axis=-1)) < 1e-4))
    ref = net_reference(x, params)
    assert bool(jnp.allclose(out, ref, atol=5e-2, rtol=0.0))   # bf16-operand tolerance

    # multi-step grid + batch-padding path (20 images -> 3 tiles of 8)
    x2 = jax.random.normal(jax.random.split(kx)[0], (20, 784), jnp.float32)
    out2 = jax.block_until_ready(fwd(x2, prep, bt=8))
    ref2 = net_reference(x2, params)
    assert out2.shape == (20, 10)
    assert bool(jnp.allclose(out2, ref2, atol=5e-2, rtol=0.0))

    print("KERNEL_OK")
</pallas_src>

<mosaic_0001>
module attributes {stable_mosaic.version = 11 : i64} {
  func.func @net_kernel(%arg0: i32, %arg1: memref<28x8x28xf32, #tpu.memory_space<vmem>>, %arg2: memref<140x256xbf16, #tpu.memory_space<vmem>>, %arg3: memref<640x256xbf16, #tpu.memory_space<vmem>>, %arg4: memref<1x128xf32, #tpu.memory_space<vmem>>, %arg5: memref<1x128xf32, #tpu.memory_space<vmem>>, %arg6: memref<512x10xbf16, #tpu.memory_space<vmem>>, %arg7: memref<1x10xf32, #tpu.memory_space<vmem>>, %arg8: memref<8x10xf32, #tpu.memory_space<vmem>>, %arg9: memref<12x8x128xf32, #tpu.memory_space<vmem>>) attributes {dimension_semantics = [#tpu.dimension_semantics<parallel>], iteration_bounds = array<i64: 1>, scalar_prefetch = 0 : i64, scratch_operands = 1 : i64, tpu.core_type = #tpu.core_type<tc>, window_params = [{transform_indices = @transform_0, window_bounds = array<i64: 28, 8, 28>}, {pipeline_mode = #tpu.pipeline_mode<synchronous>, transform_indices = @transform_1, window_bounds = array<i64: 140, 256>}, {pipeline_mode = #tpu.pipeline_mode<synchronous>, transform_indices = @transform_2, window_bounds = array<i64: 640, 256>}, {pipeline_mode = #tpu.pipeline_mode<synchronous>, transform_indices = @transform_3, window_bounds = array<i64: 1, 128>}, {pipeline_mode = #tpu.pipeline_mode<synchronous>, transform_indices = @transform_4, window_bounds = array<i64: 1, 128>}, {pipeline_mode = #tpu.pipeline_mode<synchronous>, transform_indices = @transform_5, window_bounds = array<i64: 512, 10>}, {pipeline_mode = #tpu.pipeline_mode<synchronous>, transform_indices = @transform_6, window_bounds = array<i64: 1, 10>}, {transform_indices = @transform_7, window_bounds = array<i64: 8, 10>}]} {
    %c0 = arith.constant 0 : index
    %c0_0 = arith.constant 0 : index
    %c0_1 = arith.constant 0 : index
    %0 = tpu.strided_load %arg1[%c0, %c0_0, %c0_1] {strides = array<i32: 2, 1, 1>} : memref<28x8x28xf32, #tpu.memory_space<vmem>>, vector<12x8x28xf32>
    %1 = vector.shape_cast %0 : vector<12x8x28xf32> to vector<96x28xf32>
    %c1 = arith.constant 1 : index
    %c0_2 = arith.constant 0 : index
    %c0_3 = arith.constant 0 : index
    %2 = tpu.strided_load %arg1[%c1, %c0_2, %c0_3] {strides = array<i32: 2, 1, 1>} : memref<28x8x28xf32, #tpu.memory_space<vmem>>, vector<12x8x28xf32>
    %3 = vector.shape_cast %2 : vector<12x8x28xf32> to vector<96x28xf32>
    %c2 = arith.constant 2 : index
    %c0_4 = arith.constant 0 : index
    %c0_5 = arith.constant 0 : index
    %4 = tpu.strided_load %arg1[%c2, %c0_4, %c0_5] {strides = array<i32: 2, 1, 1>} : memref<28x8x28xf32, #tpu.memory_space<vmem>>, vector<12x8x28xf32>
    %5 = vector.shape_cast %4 : vector<12x8x28xf32> to vector<96x28xf32>
    %c3 = arith.constant 3 : index
    %c0_6 = arith.constant 0 : index
    %c0_7 = arith.constant 0 : index
    %6 = tpu.strided_load %arg1[%c3, %c0_6, %c0_7] {strides = array<i32: 2, 1, 1>} : memref<28x8x28xf32, #tpu.memory_space<vmem>>, vector<12x8x28xf32>
    %7 = vector.shape_cast %6 : vector<12x8x28xf32> to vector<96x28xf32>
    %c4 = arith.constant 4 : index
    %c0_8 = arith.constant 0 : index
    %c0_9 = arith.constant 0 : index
    %8 = tpu.strided_load %arg1[%c4, %c0_8, %c0_9] {strides = array<i32: 2, 1, 1>} : memref<28x8x28xf32, #tpu.memory_space<vmem>>, vector<12x8x28xf32>
    %9 = vector.shape_cast %8 : vector<12x8x28xf32> to vector<96x28xf32>
    %10 = tpu.concatenate %1, %3, %5, %7, %9 in 1 : vector<96x28xf32>, vector<96x28xf32>, vector<96x28xf32>, vector<96x28xf32>, vector<96x28xf32> -> vector<96x140xf32>
    %11 = arith.truncf %10 : vector<96x140xf32> to vector<96x140xbf16>
    %c0_10 = arith.constant 0 : index
    %c0_11 = arith.constant 0 : index
    %12 = vector.load %arg2[%c0_10, %c0_11] : memref<140x256xbf16, #tpu.memory_space<vmem>>, vector<140x256xbf16>
    %cst = arith.constant dense<0.000000e+00> : vector<96x256xf32>
    %13 = tpu.matmul %11, %12, %cst {dimension_numbers = #tpu.dot_dimension_numbers<[1], [0], [0], [1], [0, 0, 1, 1], [], []>} : vector<96x140xbf16>, vector<140x256xbf16>, vector<96x256xf32> -> vector<96x256xf32>
    %c1_12 = arith.constant 1 : index
    %c0_13 = arith.constant 0 : index
    %c0_14 = arith.constant 0 : index
    %14 = tpu.strided_load %arg1[%c1_12, %c0_13, %c0_14] {strides = array<i32: 2, 1, 1>} : memref<28x8x28xf32, #tpu.memory_space<vmem>>, vector<12x8x28xf32>
    %15 = vector.shape_cast %14 : vector<12x8x28xf32> to vector<96x28xf32>
    %c2_15 = arith.constant 2 : index
    %c0_16 = arith.constant 0 : index
    %c0_17 = arith.constant 0 : index
    %16 = tpu.strided_load %arg1[%c2_15, %c0_16, %c0_17] {strides = array<i32: 2, 1, 1>} : memref<28x8x28xf32, #tpu.memory_space<vmem>>, vector<12x8x28xf32>
    %17 = vector.shape_cast %16 : vector<12x8x28xf32> to vector<96x28xf32>
    %c3_18 = arith.constant 3 : index
    %c0_19 = arith.constant 0 : index
    %c0_20 = arith.constant 0 : index
    %18 = tpu.strided_load %arg1[%c3_18, %c0_19, %c0_20] {strides = array<i32: 2, 1, 1>} : memref<28x8x28xf32, #tpu.memory_space<vmem>>, vector<12x8x28xf32>
    %19 = vector.shape_cast %18 : vector<12x8x28xf32> to vector<96x28xf32>
    %c4_21 = arith.constant 4 : index
    %c0_22 = arith.constant 0 : index
    %c0_23 = arith.constant 0 : index
    %20 = tpu.strided_load %arg1[%c4_21, %c0_22, %c0_23] {strides = array<i32: 2, 1, 1>} : memref<28x8x28xf32, #tpu.memory_space<vmem>>, vector<12x8x28xf32>
    %21 = vector.shape_cast %20 : vector<12x8x28xf32> to vector<96x28xf32>
    %c5 = arith.constant 5 : index
    %c0_24 = arith.constant 0 : index
    %c0_25 = arith.constant 0 : index
    %22 = tpu.strided_load %arg1[%c5, %c0_24, %c0_25] {strides = array<i32: 2, 1, 1>} : memref<28x8x28xf32, #tpu.memory_space<vmem>>, vector<12x8x28xf32>
    %23 = vector.shape_cast %22 : vector<12x8x28xf32> to vector<96x28xf32>
    %24 = tpu.concatenate %15, %17, %19, %21, %23 in 1 : vector<96x28xf32>, vector<96x28xf32>, vector<96x28xf32>, vector<96x28xf32>, vector<96x28xf32> -> vector<96x140xf32>
    %25 = arith.truncf %24 : vector<96x140xf32> to vector<96x140xbf16>
    %c0_26 = arith.constant 0 : index
    %c0_27 = arith.constant 0 : index
    %26 = vector.load %arg2[%c0_26, %c0_27] : memref<140x256xbf16, #tpu.memory_space<vmem>>, vector<140x256xbf16>
    %cst_28 = arith.constant dense<0.000000e+00> : vector<96x256xf32>
    %27 = tpu.matmul %25, %26, %cst_28 {dimension_numbers = #tpu.dot_dimension_numbers<[1], [0], [0], [1], [0, 0, 1, 1], [], []>} : vector<96x140xbf16>, vector<140x256xbf16>, vector<96x256xf32> -> vector<96x256xf32>
    %28 = arith.maximumf %13, %27 : vector<96x256xf32>
    %29 = vector.extract_strided_slice %28 {offsets = [0, 0], sizes = [96, 128], strides = [1, 1]} : vector<96x256xf32> to vector<96x128xf32>
    %30 = vector.extract_strided_slice %28 {offsets = [0, 128], sizes = [96, 128], strides = [1, 1]} : vector<96x256xf32> to vector<96x128xf32>
    %31 = arith.maximumf %29, %30 : vector<96x128xf32>
    %c0_29 = arith.constant 0 : index
    %c0_30 = arith.constant 0 : index
    %32 = vector.load %arg4[%c0_29, %c0_30] : memref<1x128xf32, #tpu.memory_space<vmem>>, vector<1x128xf32>
    %33 = vector.broadcast %32 : vector<1x128xf32> to vector<96x128xf32>
    %34 = arith.addf %31, %33 : vector<96x128xf32>
    %cst_31 = arith.constant 0.000000e+00 : f32
    %35 = vector.broadcast %cst_31 : f32 to vector<96x128xf32>
    %36 = arith.maximumf %34, %35 : vector<96x128xf32>
    %37 = vector.shape_cast %36 : vector<96x128xf32> to vector<12x8x128xf32>
    %c0_32 = arith.constant 0 : index
    %c0_33 = arith.constant 0 : index
    %c0_34 = arith.constant 0 : index
    %38 = vector.load %arg9[%c0_32, %c0_33, %c0_34] : memref<12x8x128xf32, #tpu.memory_space<vmem>>, vector<12x8x128xf32>
    tpu.vector_store %arg9[%c0_32, %c0_33, %c0_34], %37 {strides = array<i32>} : memref<12x8x128xf32, #tpu.memory_space<vmem>>, vector<12x8x128xf32>,
    %c0_35 = arith.constant 0 : index
    %c0_36 = arith.constant 0 : index
    %c0_37 = arith.constant 0 : index
    %39 = tpu.strided_load %arg9[%c0_35, %c0_36, %c0_37] {strides = array<i32: 2, 1, 1>} : memref<12x8x128xf32, #tpu.memory_space<vmem>>, vector<4x8x128xf32>
    %40 = vector.shape_cast %39 : vector<4x8x128xf32> to vector<32x128xf32>
    %c1_38 = arith.constant 1 : index
    %c0_39 = arith.constant 0 : index
    %c0_40 = arith.constant 0 : index
    %41 = tpu.strided_load %arg9[%c1_38, %c0_39, %c0_40] {strides = array<i32: 2, 1, 1>} : memref<12x8x128xf32, #tpu.memory_space<vmem>>, vector<4x8x128xf32>
    %42 = vector.shape_cast %41 : vector<4x8x128xf32> to vector<32x128xf32>
    %c2_41 = arith.constant 2 : index
    %c0_42 = arith.constant 0 : index
    %c0_43 = arith.constant 0 : index
    %43 = tpu.strided_load %arg9[%c2_41, %c0_42, %c0_43] {strides = array<i32: 2, 1, 1>} : memref<12x8x128xf32, #tpu.memory_space<vmem>>, vector<4x8x128xf32>
    %44 = vector.shape_cast %43 : vector<4x8x128xf32> to vector<32x128xf32>
    %c3_44 = arith.constant 3 : index
    %c0_45 = arith.constant 0 : index
    %c0_46 = arith.constant 0 : index
    %45 = tpu.strided_load %arg9[%c3_44, %c0_45, %c0_46] {strides = array<i32: 2, 1, 1>} : memref<12x8x128xf32, #tpu.memory_space<vmem>>, vector<4x8x128xf32>
    %46 = vector.shape_cast %45 : vector<4x8x128xf32> to vector<32x128xf32>
    %c4_47 = arith.constant 4 : index
    %c0_48 = arith.constant 0 : index
    %c0_49 = arith.constant 0 : index
    %47 = tpu.strided_load %arg9[%c4_47, %c0_48, %c0_49] {strides = array<i32: 2, 1, 1>} : memref<12x8x128xf32, #tpu.memory_space<vmem>>, vector<4x8x128xf32>
    %48 = vector.shape_cast %47 : vector<4x8x128xf32> to vector<32x128xf32>
    %49 = tpu.concatenate %40, %42, %44, %46, %48 in 1 : vector<32x128xf32>, vector<32x128xf32>, vector<32x128xf32>, vector<32x128xf32>, vector<32x128xf32> -> vector<32x640xf32>
    %50 = arith.truncf %49 : vector<32x640xf32> to vector<32x640xbf16>
    %c0_50 = arith.constant 0 : index
    %c0_51 = arith.constant 0 : index
    %51 = vector.load %arg3[%c0_50, %c0_51] : memref<640x256xbf16, #tpu.memory_space<vmem>>, vector<640x256xbf16>
    %cst_52 = arith.constant dense<0.000000e+00> : vector<32x256xf32>
    %52 = tpu.matmul %50, %51, %cst_52 {dimension_numbers = #tpu.dot_dimension_numbers<[1], [0], [0], [1], [0, 0, 1, 1], [], []>} : vector<32x640xbf16>, vector<640x256xbf16>, vector<32x256xf32> -> vector<32x256xf32>
    %c1_53 = arith.constant 1 : index
    %c0_54 = arith.constant 0 : index
    %c0_55 = arith.constant 0 : index
    %53 = tpu.strided_load %arg9[%c1_53, %c0_54, %c0_55] {strides = array<i32: 2, 1, 1>} : memref<12x8x128xf32, #tpu.memory_space<vmem>>, vector<4x8x128xf32>
    %54 = vector.shape_cast %53 : vector<4x8x128xf32> to vector<32x128xf32>
    %c2_56 = arith.constant 2 : index
    %c0_57 = arith.constant 0 : index
    %c0_58 = arith.constant 0 : index
    %55 = tpu.strided_load %arg9[%c2_56, %c0_57, %c0_58] {strides = array<i32: 2, 1, 1>} : memref<12x8x128xf32, #tpu.memory_space<vmem>>, vector<4x8x128xf32>
    %56 = vector.shape_cast %55 : vector<4x8x128xf32> to vector<32x128xf32>
    %c3_59 = arith.constant 3 : index
    %c0_60 = arith.constant 0 : index
    %c0_61 = arith.constant 0 : index
    %57 = tpu.strided_load %arg9[%c3_59, %c0_60, %c0_61] {strides = array<i32: 2, 1, 1>} : memref<12x8x128xf32, #tpu.memory_space<vmem>>, vector<4x8x128xf32>
    %58 = vector.shape_cast %57 : vector<4x8x128xf32> to vector<32x128xf32>
    %c4_62 = arith.constant 4 : index
    %c0_63 = arith.constant 0 : index
    %c0_64 = arith.constant 0 : index
    %59 = tpu.strided_load %arg9[%c4_62, %c0_63, %c0_64] {strides = array<i32: 2, 1, 1>} : memref<12x8x128xf32, #tpu.memory_space<vmem>>, vector<4x8x128xf32>
    %60 = vector.shape_cast %59 : vector<4x8x128xf32> to vector<32x128xf32>
    %c5_65 = arith.constant 5 : index
    %c0_66 = arith.constant 0 : index
    %c0_67 = arith.constant 0 : index
    %61 = tpu.strided_load %arg9[%c5_65, %c0_66, %c0_67] {strides = array<i32: 2, 1, 1>} : memref<12x8x128xf32, #tpu.memory_space<vmem>>, vector<4x8x128xf32>
    %62 = vector.shape_cast %61 : vector<4x8x128xf32> to vector<32x128xf32>
    %63 = tpu.concatenate %54, %56, %58, %60, %62 in 1 : vector<32x128xf32>, vector<32x128xf32>, vector<32x128xf32>, vector<32x128xf32>, vector<32x128xf32> -> vector<32x640xf32>
    %64 = arith.truncf %63 : vector<32x640xf32> to vector<32x640xbf16>
    %c0_68 = arith.constant 0 : index
    %c0_69 = arith.constant 0 : index
    %65 = vector.load %arg3[%c0_68, %c0_69] : memref<640x256xbf16, #tpu.memory_space<vmem>>, vector<640x256xbf16>
    %cst_70 = arith.constant dense<0.000000e+00> : vector<32x256xf32>
    %66 = tpu.matmul %64, %65, %cst_70 {dimension_numbers = #tpu.dot_dimension_numbers<[1], [0], [0], [1], [0, 0, 1, 1], [], []>} : vector<32x640xbf16>, vector<640x256xbf16>, vector<32x256xf32> -> vector<32x256xf32>
    %67 = arith.maximumf %52, %66 : vector<32x256xf32>
    %68 = vector.extract_strided_slice %67 {offsets = [0, 0], sizes = [32, 128], strides = [1, 1]} : vector<32x256xf32> to vector<32x128xf32>
    %69 = vector.extract_strided_slice %67 {offsets = [0, 128], sizes = [32, 128], strides = [1, 1]} : vector<32x256xf32> to vector<32x128xf32>
    %70 = arith.maximumf %68, %69 : vector<32x128xf32>
    %c0_71 = arith.constant 0 : index
    %c0_72 = arith.constant 0 : index
    %71 = vector.load %arg5[%c0_71, %c0_72] : memref<1x128xf32, #tpu.memory_space<vmem>>, vector<1x128xf32>
    %72 = vector.broadcast %71 : vector<1x128xf32> to vector<32x128xf32>
    %73 = arith.addf %70, %72 : vector<32x128xf32>
    %cst_73 = arith.constant 0.000000e+00 : f32
    %74 = vector.broadcast %cst_73 : f32 to vector<32x128xf32>
    %75 = arith.maximumf %73, %74 : vector<32x128xf32>
    %76 = vector.shape_cast %75 : vector<32x128xf32> to vector<4x8x128xf32>
    %77 = vector.extract_strided_slice %76 {offsets = [0, 0, 0], sizes = [1, 8, 128], strides = [1, 1, 1]} : vector<4x8x128xf32> to vector<1x8x128xf32>
    %78 = vector.shape_cast %77 : vector<1x8x128xf32> to vector<8x128xf32>
    %79 = vector.extract_strided_slice %76 {offsets = [1, 0, 0], sizes = [1, 8, 128], strides = [1, 1, 1]} : vector<4x8x128xf32> to vector<1x8x128xf32>
    %80 = vector.shape_cast %79 : vector<1x8x128xf32> to vector<8x128xf32>
    %81 = vector.extract_strided_slice %76 {offsets = [2, 0, 0], sizes = [1, 8, 128], strides = [1, 1, 1]} : vector<4x8x128xf32> to vector<1x8x128xf32>
    %82 = vector.shape_cast %81 : vector<1x8x128xf32> to vector<8x128xf32>
    %83 = vector.extract_strided_slice %76 {offsets = [3, 0, 0], sizes = [1, 8, 128], strides = [1, 1, 1]} : vector<4x8x128xf32> to vector<1x8x128xf32>
    %84 = vector.shape_cast %83 : vector<1x8x128xf32> to vector<8x128xf32>
    %85 = tpu.concatenate %78, %80, %82, %84 in 1 : vector<8x128xf32>, vector<8x128xf32>, vector<8x128xf32>, vector<8x128xf32> -> vector<8x512xf32>
    %86 = arith.truncf %85 : vector<8x512xf32> to vector<8x512xbf16>
    %c0_74 = arith.constant 0 : index
    %c0_75 = arith.constant 0 : index
    %87 = vector.load %arg6[%c0_74, %c0_75] : memref<512x10xbf16, #tpu.memory_space<vmem>>, vector<512x10xbf16>
    %cst_76 = arith.constant dense<0.000000e+00> : vector<8x10xf32>
    %88 = tpu.matmul %86, %87, %cst_76 {dimension_numbers = #tpu.dot_dimension_numbers<[1], [0], [0], [1], [0, 0, 1, 1], [], []>} : vector<8x512xbf16>, vector<512x10xbf16>, vector<8x10xf32> -> vector<8x10xf32>
    %c0_77 = arith.constant 0 : index
    %c0_78 = arith.constant 0 : index
    %89 = vector.load %arg7[%c0_77, %c0_78] : memref<1x10xf32, #tpu.memory_space<vmem>>, vector<1x10xf32>
    %90 = vector.broadcast %89 : vector<1x10xf32> to vector<8x10xf32>
    %91 = arith.addf %88, %90 : vector<8x10xf32>
    %cst_79 = arith.constant dense<0xFF800000> : vector<8xf32>
    %92 = vector.multi_reduction <maximumf>, %91, %cst_79 [1] : vector<8x10xf32> to vector<8xf32>
    %93 = vector.shape_cast %92 : vector<8xf32> to vector<8x1xf32>
    %94 = vector.broadcast %93 : vector<8x1xf32> to vector<8x10xf32>
    %95 = arith.subf %91, %94 : vector<8x10xf32>
    %96 = math.exp %95 : vector<8x10xf32>
    %cst_80 = arith.constant dense<0.000000e+00> : vector<8xf32>
    %97 = vector.multi_reduction <add>, %96, %cst_80 [1] : vector<8x10xf32> to vector<8xf32>
    %98 = vector.shape_cast %97 : vector<8xf32> to vector<8x1xf32>
    %99 = vector.broadcast %93 : vector<8x1xf32> to vector<8x10xf32>
    %100 = arith.subf %91, %99 : vector<8x10xf32>
    %101 = math.log %98 : vector<8x1xf32>
    %102 = vector.broadcast %101 : vector<8x1xf32> to vector<8x10xf32>
    %103 = arith.subf %100, %102 : vector<8x10xf32>
    %c0_81 = arith.constant 0 : index
    %c0_82 = arith.constant 0 : index
    %104 = vector.load %arg8[%c0_81, %c0_82] : memref<8x10xf32, #tpu.memory_space<vmem>>, vector<8x10xf32>
    tpu.vector_store %arg8[%c0_81, %c0_82], %103 {strides = array<i32>} : memref<8x10xf32, #tpu.memory_space<vmem>>, vector<8x10xf32>,
    return
  }
  func.func @transform_0(%arg0: i32) -> (i32, i32, i32) {
    %c0_i32 = arith.constant 0 : i32
    %c0_i32_0 = arith.constant 0 : i32
    %c0_i32_1 = arith.constant 0 : i32
    return %c0_i32, %arg0, %c0_i32_0 : i32, i32, i32
  }
  func.func @transform_1(%arg0: i32) -> (i32, i32) {
    %c0_i32 = arith.constant 0 : i32
    %c0_i32_0 = arith.constant 0 : i32
    %c0_i32_1 = arith.constant 0 : i32
    return %c0_i32, %c0_i32_0 : i32, i32
  }
  func.func @transform_2(%arg0: i32) -> (i32, i32) {
    %c0_i32 = arith.constant 0 : i32
    %c0_i32_0 = arith.constant 0 : i32
    %c0_i32_1 = arith.constant 0 : i32
    return %c0_i32, %c0_i32_0 : i32, i32
  }
  func.func @transform_3(%arg0: i32) -> (i32, i32) {
    %c0_i32 = arith.constant 0 : i32
    %c0_i32_0 = arith.constant 0 : i32
    %c0_i32_1 = arith.constant 0 : i32
    return %c0_i32, %c0_i32_0 : i32, i32
  }
  func.func @transform_4(%arg0: i32) -> (i32, i32) {
    %c0_i32 = arith.constant 0 : i32
    %c0_i32_0 = arith.constant 0 : i32
    %c0_i32_1 = arith.constant 0 : i32
    return %c0_i32, %c0_i32_0 : i32, i32
  }
  func.func @transform_5(%arg0: i32) -> (i32, i32) {
    %c0_i32 = arith.constant 0 : i32
    %c0_i32_0 = arith.constant 0 : i32
    %c0_i32_1 = arith.constant 0 : i32
    return %c0_i32, %c0_i32_0 : i32, i32
  }
  func.func @transform_6(%arg0: i32) -> (i32, i32) {
    %c0_i32 = arith.constant 0 : i32
    %c0_i32_0 = arith.constant 0 : i32
    %c0_i32_1 = arith.constant 0 : i32
    return %c0_i32, %c0_i32_0 : i32, i32
  }
  func.func @transform_7(%arg0: i32) -> (i32, i32) {
    %c0_i32 = arith.constant 0 : i32
    %c0_i32_0 = arith.constant 0 : i32
    return %arg0, %c0_i32 : i32, i32
  }
}

</mosaic_0001>

<llo_original>
// kernel: net_forward.1
$region0: #{net_forward.1}
  #allocation0 [shape = 'u32[]', space=smem, size = 0x4, offset = 0x4, fixed_abs, tag = 'smem constant byte address 0x4 - core index']
  #allocation1 [shape = 'u32[144,128]{1,0:T(1,128)}', space=vmem, size = 0x12000, scoped, tag = 'internal scratch']
  #allocation2 [shape = 'f32[12,8,128]{2,1,0:T(8,128)}', space=vmem, size = 0xc000, scoped, tag = 'scratch operand']
  %s0 = inlined_call_operand.vmem [shape: f32[28,8,28], index: 0, kind: input, shape index: {}]
  %s1 = inlined_call_operand.hbm [shape: bf16[140,256], index: 1, kind: input, shape index: {}]
  %s2 = inlined_call_operand.vmem [shape: bf16[640,256], index: 2, kind: input, shape index: {}]
  %s3 = inlined_call_operand.vmem [shape: f32[1,128], index: 3, kind: input, shape index: {}]
  %s4 = inlined_call_operand.vmem [shape: f32[1,128], index: 4, kind: input, shape index: {}]
  %s5 = inlined_call_operand.vmem [shape: bf16[512,10], index: 5, kind: input, shape index: {}]
  %s6 = inlined_call_operand.vmem [shape: f32[1,10], index: 6, kind: input, shape index: {}]
  %s7 = inlined_call_operand.vmem [shape: f32[8,10], index: 7, kind: output, shape index: {}]
  %s8 = sld [smem:[#allocation0]]
  $region42: #{net_forward.1} parent=0
    _
  %s10 = ssub.s32 1, %s8
  %s11 = scalar_select 0, %s10, %s8
  $region1: #{net_forward.1} parent=0
    #allocation3 [shape = 'u8[73728]{0}', space=vmem, size = 0x12000, scoped, tag = 'input window, operand 1, single buffered']
    #allocation4 [shape = 's32[1]{0}', space=sflag, size = 0x4, scoped, tag = 'scoped memory for net_forward.1']
    %12 = vsyncpa [#allocation4], 0
    // Predicated region
    $region2: #{net_forward.1} parent=1 // pred_check
      _
    $region3: #{net_forward.1} parent=1 // pred_check_branch
      %14 = sbr.rel (0) target = $region5
    $region4: #{net_forward.1} parent=1 // pred_region
      _
    $region5: #{net_forward.1} parent=1 // pred_fallthru
      _
    // Predicated region
    $region6: #{net_forward.1} parent=1 // pred_check
      _
    $region7: #{net_forward.1} parent=1 // pred_check_branch
      %16 = sbr.rel (0) target = $region9
    $region8: #{net_forward.1} parent=1 // pred_region
      %s18 = ssub.s32 2304, 2304
      %19 = vsyncadd [#allocation4], %s18
      %s20 = sshll.u32 [#allocation3], 4
      %s21 = int_to_ptr.vmem [resolvable:$true] %s20
      %26 = dma.hbm_to_vmem [thread:$0]  %s1, 2304, %s21, [#allocation4], 128, 128, 8
    $region9: #{net_forward.1} parent=1 // pred_fallthru
      _
    // Predicated region
    $region10: #{net_forward.1} parent=1 // pred_check
      _
    $region11: #{net_forward.1} parent=1 // pred_check_branch
      %28 = sbr.rel (0) target = $region13
    $region12: #{net_forward.1} parent=1 // pred_region
      _
    $region13: #{net_forward.1} parent=1 // pred_fallthru
      _
    // Predicated region
    $region14: #{net_forward.1} parent=1 // pred_check
      _
    $region15: #{net_forward.1} parent=1 // pred_check_branch
      %30 = sbr.rel (0) target = $region17
    $region16: #{net_forward.1} parent=1 // pred_region
      _
    $region17: #{net_forward.1} parent=1 // pred_fallthru
      _
    // Predicated region
    $region18: #{net_forward.1} parent=1 // pred_check
      _
    $region19: #{net_forward.1} parent=1 // pred_check_branch
      %32 = sbr.rel (0) target = $region21
    $region20: #{net_forward.1} parent=1 // pred_region
      _
    $region21: #{net_forward.1} parent=1 // pred_fallthru
      _
    // Predicated region
    $region22: #{net_forward.1} parent=1 // pred_check
      _
    $region23: #{net_forward.1} parent=1 // pred_check_branch
      %34 = sbr.rel (0) target = $region25
    $region24: #{net_forward.1} parent=1 // pred_region
      _
    $region25: #{net_forward.1} parent=1 // pred_fallthru
      _
    // Predicated region
    $region26: #{net_forward.1} parent=1 // pred_check
      _
    $region27: #{net_forward.1} parent=1 // pred_check_branch
      %36 = sbr.rel (0) target = $region29
    $region28: #{net_forward.1} parent=1 // pred_region
      _
    $region29: #{net_forward.1} parent=1 // pred_fallthru
      _
    // Predicated region
    $region30: #{net_forward.1} parent=1 // pred_check
      _
    $region31: #{net_forward.1} parent=1 // pred_check_branch
      %38 = sbr.rel (0) target = $region33
    $region32: #{net_forward.1} parent=1 // pred_region
      %39 = dma.done [#allocation4], 2304
    $region33: #{net_forward.1} parent=1 // pred_fallthru
      _
    %v41 = vld [vmem:[%s0] sm:$0xff]
    %v42 = vld [vmem:[%s0 + $0x10] sm:$0xff]
    %v43 = vld [vmem:[%s0 + $0x20] sm:$0xff]
    %v44 = vld [vmem:[%s0 + $0x30] sm:$0xff]
    %v45 = vld [vmem:[%s0 + $0x40] sm:$0xff]
    %v46 = vld [vmem:[%s0 + $0x50] sm:$0xff]
    %v47 = vld [vmem:[%s0 + $0x60] sm:$0xff]
    %v48 = vld [vmem:[%s0 + $0x70] sm:$0xff]
    %v49 = vld [vmem:[%s0 + $0x80] sm:$0xff]
    %v50 = vld [vmem:[%s0 + $0x90] sm:$0xff]
    %v51 = vld [vmem:[%s0 + $0xa0] sm:$0xff]
    %v52 = vld [vmem:[%s0 + $0xb0] sm:$0xff]
    %s53 = scalar_lea.vmem %s0, 8
    %v54 = vld [vmem:[%s53] sm:$0xff]
    %v55 = vld [vmem:[%s53 + $0x10] sm:$0xff]
    %v56 = vld [vmem:[%s53 + $0x20] sm:$0xff]
    %v57 = vld [vmem:[%s53 + $0x30] sm:$0xff]
    %v58 = vld [vmem:[%s53 + $0x40] sm:$0xff]
    %v59 = vld [vmem:[%s53 + $0x50] sm:$0xff]
    %v60 = vld [vmem:[%s53 + $0x60] sm:$0xff]
    %v61 = vld [vmem:[%s53 + $0x70] sm:$0xff]
    %v62 = vld [vmem:[%s53 + $0x80] sm:$0xff]
    %v63 = vld [vmem:[%s53 + $0x90] sm:$0xff]
    %v64 = vld [vmem:[%s53 + $0xa0] sm:$0xff]
    %v65 = vld [vmem:[%s53 + $0xb0] sm:$0xff]
    %s66 = scalar_lea.vmem %s0, 16
    %v67 = vld [vmem:[%s66] sm:$0xff]
    %v68 = vld [vmem:[%s66 + $0x10] sm:$0xff]
    %v69 = vld [vmem:[%s66 + $0x20] sm:$0xff]
    %v70 = vld [vmem:[%s66 + $0x30] sm:$0xff]
    %v71 = vld [vmem:[%s66 + $0x40] sm:$0xff]
    %v72 = vld [vmem:[%s66 + $0x50] sm:$0xff]
    %v73 = vld [vmem:[%s66 + $0x60] sm:$0xff]
    %v74 = vld [vmem:[%s66 + $0x70] sm:$0xff]
    %v75 = vld [vmem:[%s66 + $0x80] sm:$0xff]
    %v76 = vld [vmem:[%s66 + $0x90] sm:$0xff]
    %v77 = vld [vmem:[%s66 + $0xa0] sm:$0xff]
    %v78 = vld [vmem:[%s66 + $0xb0] sm:$0xff]
    %s79 = scalar_lea.vmem %s0, 24
    %v80 = vld [vmem:[%s79] sm:$0xff]
    %v81 = vld [vmem:[%s79 + $0x10] sm:$0xff]
    %v82 = vld [vmem:[%s79 + $0x20] sm:$0xff]
    %v83 = vld [vmem:[%s79 + $0x30] sm:$0xff]
    %v84 = vld [vmem:[%s79 + $0x40] sm:$0xff]
    %v85 = vld [vmem:[%s79 + $0x50] sm:$0xff]
    %v86 = vld [vmem:[%s79 + $0x60] sm:$0xff]
    %v87 = vld [vmem:[%s79 + $0x70] sm:$0xff]
    %v88 = vld [vmem:[%s79 + $0x80] sm:$0xff]
    %v89 = vld [vmem:[%s79 + $0x90] sm:$0xff]
    %v90 = vld [vmem:[%s79 + $0xa0] sm:$0xff]
    %v91 = vld [vmem:[%s79 + $0xb0] sm:$0xff]
    %s92 = scalar_lea.vmem %s0, 32
    %v93 = vld [vmem:[%s92] sm:$0xff]
    %v94 = vld [vmem:[%s92 + $0x10] sm:$0xff]
    %v95 = vld [vmem:[%s92 + $0x20] sm:$0xff]
    %v96 = vld [vmem:[%s92 + $0x30] sm:$0xff]
    %v97 = vld [vmem:[%s92 + $0x40] sm:$0xff]
    %v98 = vld [vmem:[%s92 + $0x50] sm:$0xff]
    %v99 = vld [vmem:[%s92 + $0x60] sm:$0xff]
    %v100 = vld [vmem:[%s92 + $0x70] sm:$0xff]
    %v101 = vld [vmem:[%s92 + $0x80] sm:$0xff]
    %v102 = vld [vmem:[%s92 + $0x90] sm:$0xff]
    %v103 = vld [vmem:[%s92 + $0xa0] sm:$0xff]
    %v104 = vld [vmem:[%s92 + $0xb0] sm:$0xff]
    %117 = vrot.lane.b32.xlu0 %v54, 28
    %v118 = vpop.permute.xlu0 %117
    %119 = vrot.lane.b32.xlu0 %v55, 28
    %v120 = vpop.permute.xlu0 %119
    %121 = vrot.lane.b32.xlu0 %v56, 28
    %v122 = vpop.permute.xlu0 %121
    %123 = vrot.lane.b32.xlu0 %v57, 28
    %v124 = vpop.permute.xlu0 %123
    %125 = vrot.lane.b32.xlu0 %v58, 28
    %v126 = vpop.permute.xlu0 %125
    %127 = vrot.lane.b32.xlu0 %v59, 28
    %v128 = vpop.permute.xlu0 %127
    %129 = vrot.lane.b32.xlu0 %v60, 28
    %v130 = vpop.permute.xlu0 %129
    %131 = vrot.lane.b32.xlu0 %v61, 28
    %v132 = vpop.permute.xlu0 %131
    %133 = vrot.lane.b32.xlu0 %v62, 28
    %v134 = vpop.permute.xlu0 %133
    %135 = vrot.lane.b32.xlu0 %v63, 28
    %v136 = vpop.permute.xlu0 %135
    %137 = vrot.lane.b32.xlu0 %v64, 28
    %v138 = vpop.permute.xlu0 %137
    %139 = vrot.lane.b32.xlu0 %v65, 28
    %v140 = vpop.permute.xlu0 %139
    %165 = vrot.lane.b32.xlu0 %v67, 56
    %v166 = vpop.permute.xlu0 %165
    %167 = vrot.lane.b32.xlu0 %v68, 56
    %v168 = vpop.permute.xlu0 %167
    %169 = vrot.lane.b32.xlu0 %v69, 56
    %v170 = vpop.permute.xlu0 %169
    %171 = vrot.lane.b32.xlu0 %v70, 56
    %v172 = vpop.permute.xlu0 %171
    %173 = vrot.lane.b32.xlu0 %v71, 56
    %v174 = vpop.permute.xlu0 %173
    %175 = vrot.lane.b32.xlu0 %v72, 56
    %v176 = vpop.permute.xlu0 %175
    %177 = vrot.lane.b32.xlu0 %v73, 56
    %v178 = vpop.permute.xlu0 %177
    %179 = vrot.lane.b32.xlu0 %v74, 56
    %v180 = vpop.permute.xlu0 %179
    %181 = vrot.lane.b32.xlu0 %v75, 56
    %v182 = vpop.permute.xlu0 %181
    %183 = vrot.lane.b32.xlu0 %v76, 56
    %v184 = vpop.permute.xlu0 %183
    %185 = vrot.lane.b32.xlu0 %v77, 56
    %v186 = vpop.permute.xlu0 %185
    %187 = vrot.lane.b32.xlu0 %v78, 56
    %v188 = vpop.permute.xlu0 %187
    %213 = vrot.lane.b32.xlu0 %v80, 84
    %v214 = vpop.permute.xlu0 %213
    %215 = vrot.lane.b32.xlu0 %v81, 84
    %v216 = vpop.permute.xlu0 %215
    %217 = vrot.lane.b32.xlu0 %v82, 84
    %v218 = vpop.permute.xlu0 %217
    %219 = vrot.lane.b32.xlu0 %v83, 84
    %v220 = vpop.permute.xlu0 %219
    %221 = vrot.lane.b32.xlu0 %v84, 84
    %v222 = vpop.permute.xlu0 %221
    %223 = vrot.lane.b32.xlu0 %v85, 84
    %v224 = vpop.permute.xlu0 %223
    %225 = vrot.lane.b32.xlu0 %v86, 84
    %v226 = vpop.permute.xlu0 %225
    %227 = vrot.lane.b32.xlu0 %v87, 84
    %v228 = vpop.permute.xlu0 %227
    %229 = vrot.lane.b32.xlu0 %v88, 84
    %v230 = vpop.permute.xlu0 %229
    %231 = vrot.lane.b32.xlu0 %v89, 84
    %v232 = vpop.permute.xlu0 %231
    %233 = vrot.lane.b32.xlu0 %v90, 84
    %v234 = vpop.permute.xlu0 %233
    %235 = vrot.lane.b32.xlu0 %v91, 84
    %v236 = vpop.permute.xlu0 %235
    %261 = vrot.lane.b32.xlu0 %v93, 112
    %v262 = vpop.permute.xlu0 %261
    %263 = vrot.lane.b32.xlu0 %v94, 112
    %v264 = vpop.permute.xlu0 %263
    %265 = vrot.lane.b32.xlu0 %v95, 112
    %v266 = vpop.permute.xlu0 %265
    %267 = vrot.lane.b32.xlu0 %v96, 112
    %v268 = vpop.permute.xlu0 %267
    %269 = vrot.lane.b32.xlu0 %v97, 112
    %v270 = vpop.permute.xlu0 %269
    %271 = vrot.lane.b32.xlu0 %v98, 112
    %v272 = vpop.permute.xlu0 %271
    %273 = vrot.lane.b32.xlu0 %v99, 112
    %v274 = vpop.permute.xlu0 %273
    %275 = vrot.lane.b32.xlu0 %v100, 112
    %v276 = vpop.permute.xlu0 %275
    %277 = vrot.lane.b32.xlu0 %v101, 112
    %v278 = vpop.permute.xlu0 %277
    %279 = vrot.lane.b32.xlu0 %v102, 112
    %v280 = vpop.permute.xlu0 %279
    %281 = vrot.lane.b32.xlu0 %v103, 112
    %v282 = vpop.permute.xlu0 %281
    %283 = vrot.lane.b32.xlu0 %v104, 112
    %v284 = vpop.permute.xlu0 %283
    %vm297 = vcmask 228352
    %v298 = vsel %vm297, %v41, %v118
    %v299 = vsel %vm297, %v42, %v120
    %v300 = vsel %vm297, %v43, %v122
    %v301 = vsel %vm297, %v44, %v124
    %v302 = vsel %vm297, %v45, %v126
    %v303 = vsel %vm297, %v46, %v128
    %v304 = vsel %vm297, %v47, %v130
    %v305 = vsel %vm297, %v48, %v132
    %v306 = vsel %vm297, %v49, %v134
    %v307 = vsel %vm297, %v50, %v136
    %v308 = vsel %vm297, %v51, %v138
    %v309 = vsel %vm297, %v52, %v140
    %vm310 = vcmask 457728
    %v311 = vsel %vm310, %v298, %v166
    %v312 = vsel %vm310, %v299, %v168
    %v313 = vsel %vm310, %v300, %v170
    %v314 = vsel %vm310, %v301, %v172
    %v315 = vsel %vm310, %v302, %v174
    %v316 = vsel %vm310, %v303, %v176
    %v317 = vsel %vm310, %v304, %v178
    %v318 = vsel %vm310, %v305, %v180
    %v319 = vsel %vm310, %v306, %v182
    %v320 = vsel %vm310, %v307, %v184
    %v321 = vsel %vm310, %v308, %v186
    %v322 = vsel %vm310, %v309, %v188
    %vm323 = vcmask 687104
    %v324 = vsel %vm323, %v311, %v214
    %v325 = vsel %vm323, %v312, %v216
    %v326 = vsel %vm323, %v313, %v218
    %v327 = vsel %vm323, %v314, %v220
    %v328 = vsel %vm323, %v315, %v222
    %v329 = vsel %vm323, %v316, %v224
    %v330 = vsel %vm323, %v317, %v226
    %v331 = vsel %vm323, %v318, %v228
    %v332 = vsel %vm323, %v319, %v230
    %v333 = vsel %vm323, %v320, %v232
    %v334 = vsel %vm323, %v321, %v234
    %v335 = vsel %vm323, %v322, %v236
    %vm336 = vcmask 916480
    %v337 = vsel %vm336, %v324, %v262
    %v338 = vsel %vm336, %v325, %v264
    %v339 = vsel %vm336, %v326, %v266
    %v340 = vsel %vm336, %v327, %v268
    %v341 = vsel %vm336, %v328, %v270
    %v342 = vsel %vm336, %v329, %v272
    %v343 = vsel %vm336, %v330, %v274
    %v344 = vsel %vm336, %v331, %v276
    %v345 = vsel %vm336, %v332, %v278
    %v346 = vsel %vm336, %v333, %v280
    %v347 = vsel %vm336, %v334, %v282
    %v348 = vsel %vm336, %v335, %v284
    %v349 = vpack.c.bf16 %v338, %v337
    %v350 = vpack.c.bf16 %v264, %v262
    %v351 = vpack.c.bf16 %v340, %v339
    %v352 = vpack.c.bf16 %v268, %v266
    %v353 = vpack.c.bf16 %v342, %v341
    %v354 = vpack.c.bf16 %v272, %v270
    %v355 = vpack.c.bf16 %v344, %v343
    %v356 = vpack.c.bf16 %v276, %v274
    %v357 = vpack.c.bf16 %v346, %v345
    %v358 = vpack.c.bf16 %v280, %v278
    %v359 = vpack.c.bf16 %v348, %v347
    %v360 = vpack.c.bf16 %v284, %v282
    %v361 = vld [vmem:[#allocation3] sm:$0xff]
    %v362 = vld [vmem:[#allocation3 + $0x8] sm:$0xff]
    %v363 = vld [vmem:[#allocation3 + $0x10] sm:$0xff]
    %v364 = vld [vmem:[#allocation3 + $0x18] sm:$0xff]
    %v365 = vld [vmem:[#allocation3 + $0x20] sm:$0xff]
    %v366 = vld [vmem:[#allocation3 + $0x28] sm:$0xff]
    %v367 = vld [vmem:[#allocation3 + $0x30] sm:$0xff]
    %v368 = vld [vmem:[#allocation3 + $0x38] sm:$0xff]
    %v369 = vld [vmem:[#allocation3 + $0x40] sm:$0xff]
    %v370 = vld [vmem:[#allocation3 + $0x48] sm:$0xff]
    %v371 = vld [vmem:[#allocation3 + $0x50] sm:$0xff]
    %v372 = vld [vmem:[#allocation3 + $0x58] sm:$0xff]
    %v373 = vld [vmem:[#allocation3 + $0x60] sm:$0xff]
    %v374 = vld [vmem:[#allocation3 + $0x68] sm:$0xff]
    %v375 = vld [vmem:[#allocation3 + $0x70] sm:$0xff]
    %v376 = vld [vmem:[#allocation3 + $0x78] sm:$0xff]
    %v377 = vld [vmem:[#allocation3 + $0x80] sm:$0xff]
    %v378 = vld [vmem:[#allocation3 + $0x88] sm:$0x33]
    %v397 = vunpack.c.l.b16 %v361
    %v398 = vunpack.c.h.b16 %v361
    %v399 = vunpack.c.l.b16 %v362
    %v400 = vunpack.c.h.b16 %v362
    %v401 = vunpack.c.l.b16 %v363
    %v402 = vunpack.c.h.b16 %v363
    %v403 = vunpack.c.l.b16 %v364
    %v404 = vunpack.c.h.b16 %v364
    %v405 = vunpack.c.l.b16 %v365
    %v406 = vunpack.c.h.b16 %v365
    %v407 = vunpack.c.l.b16 %v366
    %v408 = vunpack.c.h.b16 %v366
    %v409 = vunpack.c.l.b16 %v367
    %v410 = vunpack.c.h.b16 %v367
    %v411 = vunpack.c.l.b16 %v368
    %v412 = vunpack.c.h.b16 %v368
    %v413 = vunpack.c.l.b16 %v369
    %v414 = vunpack.c.h.b16 %v369
    %v415 = vunpack.c.l.b16 %v370
    %v416 = vunpack.c.h.b16 %v370
    %v417 = vunpack.c.l.b16 %v371
    %v418 = vunpack.c.h.b16 %v371
    %v419 = vunpack.c.l.b16 %v372
    %v420 = vunpack.c.h.b16 %v372
    %v421 = vunpack.c.l.b16 %v373
    %v422 = vunpack.c.h.b16 %v373
    %v423 = vunpack.c.l.b16 %v374
    %v424 = vunpack.c.h.b16 %v374
    %v425 = vunpack.c.l.b16 %v375
    %v426 = vunpack.c.h.b16 %v375
    %v427 = vunpack.c.l.b16 %v376
    %v428 = vunpack.c.h.b16 %v376
    %v429 = vunpack.c.l.b16 %v377
    %v430 = vunpack.c.h.b16 %v377
    %v431 = vunpack.c.l.b16 %v378
    %v432 = vunpack.c.h.b16 %v378
    %v433 = vpack.c.b16 %v399, %v397
    %v434 = vpack.c.b16 %v400, %v398
    %v435 = vpack.c.b16 %v403, %v401
    %v436 = vpack.c.b16 %v404, %v402
    %v437 = vpack.c.b16 %v407, %v405
    %v438 = vpack.c.b16 %v408, %v406
    %v439 = vpack.c.b16 %v411, %v409
    %v440 = vpack.c.b16 %v412, %v410
    %v441 = vpack.c.b16 %v415, %v413
    %v442 = vpack.c.b16 %v416, %v414
    %v443 = vpack.c.b16 %v419, %v417
    %v444 = vpack.c.b16 %v420, %v418
    %v445 = vpack.c.b16 %v423, %v421
    %v446 = vpack.c.b16 %v424, %v422
    %v447 = vpack.c.b16 %v427, %v425
    %v448 = vpack.c.b16 %v428, %v426
    %v449 = vpack.c.b16 %v431, %v429
    %v450 = vpack.c.b16 %v432, %v430
    %vm467 = vcmask 97280
    %v469 = vsel %vm467, %v350, 0
    %v472 = vsel %vm467, %v352, 0
    %v475 = vsel %vm467, %v354, 0
    %v478 = vsel %vm467, %v356, 0
    %v481 = vsel %vm467, %v358, 0
    %v484 = vsel %vm467, %v360, 0
    %vm486 = vcmask 1045504
    %v488 = vsel %vm486, %v449, 0
    %v491 = vsel %vm486, %v450, 0
    %493 = vmatprep.subr.bf16.mxu0 %v448
    %494 = vmatpush1.bf16.msra.mxu0 %v447
    %495 = vmatprep.subr.bf16.mxu0 %v446
    %496 = vmatpush1.bf16.msra.mxu0 %v445
    %497 = vmatprep.subr.bf16.mxu0 %v444
    %498 = vmatpush1.bf16.msra.mxu0 %v443
    %499 = vmatprep.subr.bf16.mxu0 %v442
    %500 = vmatpush1.bf16.msra.mxu0 %v441
    %501 = vmatprep.subr.bf16.mxu0 %v440
    %502 = vmatpush1.bf16.msra.mxu0 %v439
    %503 = vmatprep.subr.bf16.mxu0 %v438
    %504 = vmatpush1.bf16.msra.mxu0 %v437
    %505 = vmatprep.subr.bf16.mxu0 %v436
    %506 = vmatpush1.bf16.msra.mxu0 %v435
    %507 = vmatprep.subr.bf16.mxu0 %v434
    %508 = vmatpush1.bf16.msra.mxu0 %v433
    %509 = vmatprep.subr.bf16.mxu0 0
    %510 = vmatpush2.bf16.msra.mxu0 0
    %511 = vmatprep.subr.bf16.mxu0 0
    %512 = vmatpush2.bf16.msra.mxu0 0
    %513 = vmatprep.subr.bf16.mxu0 0
    %514 = vmatpush2.bf16.msra.mxu0 0
    %515 = vmatprep.subr.bf16.mxu0 0
    %516 = vmatpush2.bf16.msra.mxu0 0
    %517 = vmatprep.subr.bf16.mxu0 0
    %518 = vmatpush2.bf16.msra.mxu0 0
    %519 = vmatprep.subr.bf16.mxu0 0
    %520 = vmatpush2.bf16.msra.mxu0 0
    %521 = vmatprep.subr.bf16.mxu0 0
    %522 = vmatpush2.bf16.msra.mxu0 0
    %523 = vmatprep.subr.bf16.mxu0 %v491
    %524 = vmatpush2.bf16.msra.mxu0 %v488
    %525 = vmatprep.mubr.bf16.mxu0 %v469
    %526 = vmatmul.mubr.bf16.gmra.mxu0 %v349
    %v527 = vpop.f32.mrf.mxu0
    %v528 = vadd.f32 0.0, %v527
    %v529 = vpop.f32.mrf.mxu0
    %v530 = vadd.f32 0.0, %v529
    %v531 = vpop.f32.mrf.mxu0
    %v532 = vadd.f32 0.0, %v531
    %v533 = vpop.f32.mrf.mxu0
    %v534 = vadd.f32 0.0, %v533
    %535 = vmatprep.mubr.bf16.mxu0 %v472
    %536 = vmatmul.mubr.bf16.gmra.mxu0 %v351
    %v537 = vpop.f32.mrf.mxu0
    %v538 = vadd.f32 0.0, %v537
    %v539 = vpop.f32.mrf.mxu0
    %v540 = vadd.f32 0.0, %v539
    %v541 = vpop.f32.mrf.mxu0
    %v542 = vadd.f32 0.0, %v541
    %v543 = vpop.f32.mrf.mxu0
    %v544 = vadd.f32 0.0, %v543
    %545 = vmatprep.mubr.bf16.mxu0 %v475
    %546 = vmatmul.mubr.bf16.gmra.mxu0 %v353
    %v547 = vpop.f32.mrf.mxu0
    %v548 = vadd.f32 0.0, %v547
    %v549 = vpop.f32.mrf.mxu0
    %v550 = vadd.f32 0.0, %v549
    %v551 = vpop.f32.mrf.mxu0
    %v552 = vadd.f32 0.0, %v551
    %v553 = vpop.f32.mrf.mxu0
    %v554 = vadd.f32 0.0, %v553
    %555 = vmatprep.mubr.bf16.mxu0 %v478
    %556 = vmatmul.mubr.bf16.gmra.mxu0 %v355
    %v557 = vpop.f32.mrf.mxu0
    %v558 = vadd.f32 0.0, %v557
    %v559 = vpop.f32.mrf.mxu0
    %v560 = vadd.f32 0.0, %v559
    %v561 = vpop.f32.mrf.mxu0
    %v562 = vadd.f32 0.0, %v561
    %v563 = vpop.f32.mrf.mxu0
    %v564 = vadd.f32 0.0, %v563
    %565 = vmatprep.mubr.bf16.mxu0 %v481
    %566 = vmatmul.mubr.bf16.gmra.mxu0 %v357
    %v567 = vpop.f32.mrf.mxu0
    %v568 = vadd.f32 0.0, %v567
    %v569 = vpop.f32.mrf.mxu0
    %v570 = vadd.f32 0.0, %v569
    %v571 = vpop.f32.mrf.mxu0
    %v572 = vadd.f32 0.0, %v571
    %v573 = vpop.f32.mrf.mxu0
    %v574 = vadd.f32 0.0, %v573
    %575 = vmatprep.mubr.bf16.mxu0 %v484
    %576 = vmatmul.mubr.bf16.gmra.mxu0 %v359
    %v577 = vpop.f32.mrf.mxu0
    %v578 = vadd.f32 0.0, %v577
    %v579 = vpop.f32.mrf.mxu0
    %v580 = vadd.f32 0.0, %v579
    %v581 = vpop.f32.mrf.mxu0
    %v582 = vadd.f32 0.0, %v581
    %v583 = vpop.f32.mrf.mxu0
    %v584 = vadd.f32 0.0, %v583
    %585 = vdwg.mxu0
    %s586 = scalar_lea.vmem %s0, 40
    %v587 = vld [vmem:[%s586] sm:$0xff]
    %v588 = vld [vmem:[%s586 + $0x10] sm:$0xff]
    %v589 = vld [vmem:[%s586 + $0x20] sm:$0xff]
    %v590 = vld [vmem:[%s586 + $0x30] sm:$0xff]
    %v591 = vld [vmem:[%s586 + $0x40] sm:$0xff]
    %v592 = vld [vmem:[%s586 + $0x50] sm:$0xff]
    %v593 = vld [vmem:[%s586 + $0x60] sm:$0xff]
    %v594 = vld [vmem:[%s586 + $0x70] sm:$0xff]
    %v595 = vld [vmem:[%s586 + $0x80] sm:$0xff]
    %v596 = vld [vmem:[%s586 + $0x90] sm:$0xff]
    %v597 = vld [vmem:[%s586 + $0xa0] sm:$0xff]
    %v598 = vld [vmem:[%s586 + $0xb0] sm:$0xff]
    %599 = vrot.lane.b32.xlu0 %v67, 28
    %v600 = vpop.permute.xlu0 %599
    %601 = vrot.lane.b32.xlu0 %v68, 28
    %v602 = vpop.permute.xlu0 %601
    %603 = vrot.lane.b32.xlu0 %v69, 28
    %v604 = vpop.permute.xlu0 %603
    %605 = vrot.lane.b32.xlu0 %v70, 28
    %v606 = vpop.permute.xlu0 %605
    %607 = vrot.lane.b32.xlu0 %v71, 28
    %v608 = vpop.permute.xlu0 %607
    %609 = vrot.lane.b32.xlu0 %v72, 28
    %v610 = vpop.permute.xlu0 %609
    %611 = vrot.lane.b32.xlu0 %v73, 28
    %v612 = vpop.permute.xlu0 %611
    %613 = vrot.lane.b32.xlu0 %v74, 28
    %v614 = vpop.permute.xlu0 %613
    %615 = vrot.lane.b32.xlu0 %v75, 28
    %v616 = vpop.permute.xlu0 %615
    %617 = vrot.lane.b32.xlu0 %v76, 28
    %v618 = vpop.permute.xlu0 %617
    %619 = vrot.lane.b32.xlu0 %v77, 28
    %v620 = vpop.permute.xlu0 %619
    %621 = vrot.lane.b32.xlu0 %v78, 28
    %v622 = vpop.permute.xlu0 %621
    %635 = vrot.lane.b32.xlu0 %v80, 56
    %v636 = vpop.permute.xlu0 %635
    %637 = vrot.lane.b32.xlu0 %v81, 56
    %v638 = vpop.permute.xlu0 %637
    %639 = vrot.lane.b32.xlu0 %v82, 56
    %v640 = vpop.permute.xlu0 %639
    %641 = vrot.lane.b32.xlu0 %v83, 56
    %v642 = vpop.permute.xlu0 %641
    %643 = vrot.lane.b32.xlu0 %v84, 56
    %v644 = vpop.permute.xlu0 %643
    %645 = vrot.lane.b32.xlu0 %v85, 56
    %v646 = vpop.permute.xlu0 %645
    %647 = vrot.lane.b32.xlu0 %v86, 56
    %v648 = vpop.permute.xlu0 %647
    %649 = vrot.lane.b32.xlu0 %v87, 56
    %v650 = vpop.permute.xlu0 %649
    %651 = vrot.lane.b32.xlu0 %v88, 56
    %v652 = vpop.permute.xlu0 %651
    %653 = vrot.lane.b32.xlu0 %v89, 56
    %v654 = vpop.permute.xlu0 %653
    %655 = vrot.lane.b32.xlu0 %v90, 56
    %v656 = vpop.permute.xlu0 %655
    %657 = vrot.lane.b32.xlu0 %v91, 56
    %v658 = vpop.permute.xlu0 %657
    %671 = vrot.lane.b32.xlu0 %v93, 84
    %v672 = vpop.permute.xlu0 %671
    %673 = vrot.lane.b32.xlu0 %v94, 84
    %v674 = vpop.permute.xlu0 %673
    %675 = vrot.lane.b32.xlu0 %v95, 84
    %v676 = vpop.permute.xlu0 %675
    %677 = vrot.lane.b32.xlu0 %v96, 84
    %v678 = vpop.permute.xlu0 %677
    %679 = vrot.lane.b32.xlu0 %v97, 84
    %v680 = vpop.permute.xlu0 %679
    %681 = vrot.lane.b32.xlu0 %v98, 84
    %v682 = vpop.permute.xlu0 %681
    %683 = vrot.lane.b32.xlu0 %v99, 84
    %v684 = vpop.permute.xlu0 %683
    %685 = vrot.lane.b32.xlu0 %v100, 84
    %v686 = vpop.permute.xlu0 %685
    %687 = vrot.lane.b32.xlu0 %v101, 84
    %v688 = vpop.permute.xlu0 %687
    %689 = vrot.lane.b32.xlu0 %v102, 84
    %v690 = vpop.permute.xlu0 %689
    %691 = vrot.lane.b32.xlu0 %v103, 84
    %v692 = vpop.permute.xlu0 %691
    %693 = vrot.lane.b32.xlu0 %v104, 84
    %v694 = vpop.permute.xlu0 %693
    %719 = vrot.lane.b32.xlu0 %v587, 112
    %v720 = vpop.permute.xlu0 %719
    %721 = vrot.lane.b32.xlu0 %v588, 112
    %v722 = vpop.permute.xlu0 %721
    %723 = vrot.lane.b32.xlu0 %v589, 112
    %v724 = vpop.permute.xlu0 %723
    %725 = vrot.lane.b32.xlu0 %v590, 112
    %v726 = vpop.permute.xlu0 %725
    %727 = vrot.lane.b32.xlu0 %v591, 112
    %v728 = vpop.permute.xlu0 %727
    %729 = vrot.lane.b32.xlu0 %v592, 112
    %v730 = vpop.permute.xlu0 %729
    %731 = vrot.lane.b32.xlu0 %v593, 112
    %v732 = vpop.permute.xlu0 %731
    %733 = vrot.lane.b32.xlu0 %v594, 112
    %v734 = vpop.permute.xlu0 %733
    %735 = vrot.lane.b32.xlu0 %v595, 112
    %v736 = vpop.permute.xlu0 %735
    %737 = vrot.lane.b32.xlu0 %v596, 112
    %v738 = vpop.permute.xlu0 %737
    %739 = vrot.lane.b32.xlu0 %v597, 112
    %v740 = vpop.permute.xlu0 %739
    %741 = vrot.lane.b32.xlu0 %v598, 112
    %v742 = vpop.permute.xlu0 %741
    %v755 = vsel %vm297, %v54, %v600
    %v756 = vsel %vm297, %v55, %v602
    %v757 = vsel %vm297, %v56, %v604
    %v758 = vsel %vm297, %v57, %v606
    %v759 = vsel %vm297, %v58, %v608
    %v760 = vsel %vm297, %v59, %v610
    %v761 = vsel %vm297, %v60, %v612
    %v762 = vsel %vm297, %v61, %v614
    %v763 = vsel %vm297, %v62, %v616
    %v764 = vsel %vm297, %v63, %v618
    %v765 = vsel %vm297, %v64, %v620
    %v766 = vsel %vm297, %v65, %v622
    %v767 = vsel %vm310, %v755, %v636
    %v768 = vsel %vm310, %v756, %v638
    %v769 = vsel %vm310, %v757, %v640
    %v770 = vsel %vm310, %v758, %v642
    %v771 = vsel %vm310, %v759, %v644
    %v772 = vsel %vm310, %v760, %v646
    %v773 = vsel %vm310, %v761, %v648
    %v774 = vsel %vm310, %v762, %v650
    %v775 = vsel %vm310, %v763, %v652
    %v776 = vsel %vm310, %v764, %v654
    %v777 = vsel %vm310, %v765, %v656
    %v778 = vsel %vm310, %v766, %v658
    %v779 = vsel %vm323, %v767, %v672
    %v780 = vsel %vm323, %v768, %v674
    %v781 = vsel %vm323, %v769, %v676
    %v782 = vsel %vm323, %v770, %v678
    %v783 = vsel %vm323, %v771, %v680
    %v784 = vsel %vm323, %v772, %v682
    %v785 = vsel %vm323, %v773, %v684
    %v786 = vsel %vm323, %v774, %v686
    %v787 = vsel %vm323, %v775, %v688
    %v788 = vsel %vm323, %v776, %v690
    %v789 = vsel %vm323, %v777, %v692
    %v790 = vsel %vm323, %v778, %v694
    %v791 = vsel %vm336, %v779, %v720
    %v792 = vsel %vm336, %v780, %v722
    %v793 = vsel %vm336, %v781, %v724
    %v794 = vsel %vm336, %v782, %v726
    %v795 = vsel %vm336, %v783, %v728
    %v796 = vsel %vm336, %v784, %v730
    %v797 = vsel %vm336, %v785, %v732
    %v798 = vsel %vm336, %v786, %v734
    %v799 = vsel %vm336, %v787, %v736
    %v800 = vsel %vm336, %v788, %v738
    %v801 = vsel %vm336, %v789, %v740
    %v802 = vsel %vm336, %v790, %v742
    %v803 = vpack.c.bf16 %v792, %v791
    %v804 = vpack.c.bf16 %v722, %v720
    %v805 = vpack.c.bf16 %v794, %v793
    %v806 = vpack.c.bf16 %v726, %v724
    %v807 = vpack.c.bf16 %v796, %v795
    %v808 = vpack.c.bf16 %v730, %v728
    %v809 = vpack.c.bf16 %v798, %v797
    %v810 = vpack.c.bf16 %v734, %v732
    %v811 = vpack.c.bf16 %v800, %v799
    %v812 = vpack.c.bf16 %v738, %v736
    %v813 = vpack.c.bf16 %v802, %v801
    %v814 = vpack.c.bf16 %v742, %v740
    %v816 = vsel %vm467, %v804, 0
    %v819 = vsel %vm467, %v806, 0
    %v822 = vsel %vm467, %v808, 0
    %v825 = vsel %vm467, %v810, 0
    %v828 = vsel %vm467, %v812, 0
    %v831 = vsel %vm467, %v814, 0
    %833 = vmatprep.subr.bf16.mxu0 %v448
    %834 = vmatpush1.bf16.msra.mxu0 %v447
    %835 = vmatprep.subr.bf16.mxu0 %v446
    %836 = vmatpush1.bf16.msra.mxu0 %v445
    %837 = vmatprep.subr.bf16.mxu0 %v444
    %838 = vmatpush1.bf16.msra.mxu0 %v443
    %839 = vmatprep.subr.bf16.mxu0 %v442
    %840 = vmatpush1.bf16.msra.mxu0 %v441
    %841 = vmatprep.subr.bf16.mxu0 %v440
    %842 = vmatpush1.bf16.msra.mxu0 %v439
    %843 = vmatprep.subr.bf16.mxu0 %v438
    %844 = vmatpush1.bf16.msra.mxu0 %v437
    %845 = vmatprep.subr.bf16.mxu0 %v436
    %846 = vmatpush1.bf16.msra.mxu0 %v435
    %847 = vmatprep.subr.bf16.mxu0 %v434
    %848 = vmatpush1.bf16.msra.mxu0 %v433
    %849 = vmatprep.subr.bf16.mxu0 0
    %850 = vmatpush2.bf16.msra.mxu0 0
    %851 = vmatprep.subr.bf16.mxu0 0
    %852 = vmatpush2.bf16.msra.mxu0 0
    %853 = vmatprep.subr.bf16.mxu0 0
    %854 = vmatpush2.bf16.msra.mxu0 0
    %855 = vmatprep.subr.bf16.mxu0 0
    %856 = vmatpush2.bf16.msra.mxu0 0
    %857 = vmatprep.subr.bf16.mxu0 0
    %858 = vmatpush2.bf16.msra.mxu0 0
    %859 = vmatprep.subr.bf16.mxu0 0
    %860 = vmatpush2.bf16.msra.mxu0 0
    %861 = vmatprep.subr.bf16.mxu0 0
    %862 = vmatpush2.bf16.msra.mxu0 0
    %863 = vmatprep.subr.bf16.mxu0 %v491
    %864 = vmatpush2.bf16.msra.mxu0 %v488
    %865 = vmatprep.mubr.bf16.mxu0 %v816
    %866 = vmatmul.mubr.bf16.gmra.mxu0 %v803
    %v867 = vpop.f32.mrf.mxu0
    %v868 = vadd.f32 0.0, %v867
    %v869 = vpop.f32.mrf.mxu0
    %v870 = vadd.f32 0.0, %v869
    %v871 = vpop.f32.mrf.mxu0
    %v872 = vadd.f32 0.0, %v871
    %v873 = vpop.f32.mrf.mxu0
    %v874 = vadd.f32 0.0, %v873
    %875 = vmatprep.mubr.bf16.mxu0 %v819
    %876 = vmatmul.mubr.bf16.gmra.mxu0 %v805
    %v877 = vpop.f32.mrf.mxu0
    %v878 = vadd.f32 0.0, %v877
    %v879 = vpop.f32.mrf.mxu0
    %v880 = vadd.f32 0.0, %v879
    %v881 = vpop.f32.mrf.mxu0
    %v882 = vadd.f32 0.0, %v881
    %v883 = vpop.f32.mrf.mxu0
    %v884 = vadd.f32 0.0, %v883
    %885 = vmatprep.mubr.bf16.mxu0 %v822
    %886 = vmatmul.mubr.bf16.gmra.mxu0 %v807
    %v887 = vpop.f32.mrf.mxu0
    %v888 = vadd.f32 0.0, %v887
    %v889 = vpop.f32.mrf.mxu0
    %v890 = vadd.f32 0.0, %v889
    %v891 = vpop.f32.mrf.mxu0
    %v892 = vadd.f32 0.0, %v891
    %v893 = vpop.f32.mrf.mxu0
    %v894 = vadd.f32 0.0, %v893
    %895 = vmatprep.mubr.bf16.mxu0 %v825
    %896 = vmatmul.mubr.bf16.gmra.mxu0 %v809
    %v897 = vpop.f32.mrf.mxu0
    %v898 = vadd.f32 0.0, %v897
    %v899 = vpop.f32.mrf.mxu0
    %v900 = vadd.f32 0.0, %v899
    %v901 = vpop.f32.mrf.mxu0
    %v902 = vadd.f32 0.0, %v901
    %v903 = vpop.f32.mrf.mxu0
    %v904 = vadd.f32 0.0, %v903
    %905 = vmatprep.mubr.bf16.mxu0 %v828
    %906 = vmatmul.mubr.bf16.gmra.mxu0 %v811
    %v907 = vpop.f32.mrf.mxu0
    %v908 = vadd.f32 0.0, %v907
    %v909 = vpop.f32.mrf.mxu0
    %v910 = vadd.f32 0.0, %v909
    %v911 = vpop.f32.mrf.mxu0
    %v912 = vadd.f32 0.0, %v911
    %v913 = vpop.f32.mrf.mxu0
    %v914 = vadd.f32 0.0, %v913
    %915 = vmatprep.mubr.bf16.mxu0 %v831
    %916 = vmatmul.mubr.bf16.gmra.mxu0 %v813
    %v917 = vpop.f32.mrf.mxu0
    %v918 = vadd.f32 0.0, %v917
    %v919 = vpop.f32.mrf.mxu0
    %v920 = vadd.f32 0.0, %v919
    %v921 = vpop.f32.mrf.mxu0
    %v922 = vadd.f32 0.0, %v921
    %v923 = vpop.f32.mrf.mxu0
    %v924 = vadd.f32 0.0, %v923
    %925 = vdwg.mxu0
    %v926 = vmax.f32 %v528, %v868
    %v927 = vmax.f32 %v530, %v870
    %v928 = vmax.f32 %v532, %v872
    %v929 = vmax.f32 %v534, %v874
    %v930 = vmax.f32 %v538, %v878
    %v931 = vmax.f32 %v540, %v880
    %v932 = vmax.f32 %v542, %v882
    %v933 = vmax.f32 %v544, %v884
    %v934 = vmax.f32 %v548, %v888
    %v935 = vmax.f32 %v550, %v890
    %v936 = vmax.f32 %v552, %v892
    %v937 = vmax.f32 %v554, %v894
    %v938 = vmax.f32 %v558, %v898
    %v939 = vmax.f32 %v560, %v900
    %v940 = vmax.f32 %v562, %v902
    %v941 = vmax.f32 %v564, %v904
    %v942 = vmax.f32 %v568, %v908
    %v943 = vmax.f32 %v570, %v910
    %v944 = vmax.f32 %v572, %v912
    %v945 = vmax.f32 %v574, %v914
    %v946 = vmax.f32 %v578, %v918
    %v947 = vmax.f32 %v580, %v920
    %v948 = vmax.f32 %v582, %v922
    %v949 = vmax.f32 %v584, %v924
    %v950 = vmax.f32 %v926, %v927
    %v951 = vmax.f32 %v928, %v929
    %v952 = vmax.f32 %v930, %v931
    %v953 = vmax.f32 %v932, %v933
    %v954 = vmax.f32 %v934, %v935
    %v955 = vmax.f32 %v936, %v937
    %v956 = vmax.f32 %v938, %v939
    %v957 = vmax.f32 %v940, %v941
    %v958 = vmax.f32 %v942, %v943
    %v959 = vmax.f32 %v944, %v945
    %v960 = vmax.f32 %v946, %v947
    %v961 = vmax.f32 %v948, %v949
    %v962 = vld [vmem:[%s3] sm:$0x1]
    %v964 = vlaneseq
    %v965 = vshrl.u32 %v964, 7
    %v966 = vsub.s32 0, %v965
    %v967 = vrot.slane %v962, %v966
    %v969 = vadd.f32 %v950, %v967
    %v970 = vadd.f32 %v951, %v967
    %v971 = vadd.f32 %v952, %v967
    %v972 = vadd.f32 %v953, %v967
    %v973 = vadd.f32 %v954, %v967
    %v974 = vadd.f32 %v955, %v967
    %v975 = vadd.f32 %v956, %v967
    %v976 = vadd.f32 %v957, %v967
    %v977 = vadd.f32 %v958, %v967
    %v978 = vadd.f32 %v959, %v967
    %v979 = vadd.f32 %v960, %v967
    %v980 = vadd.f32 %v961, %v967
    %v981 = vmax.f32 %v969, 0.0
    %v982 = vmax.f32 %v970, 0.0
    %v983 = vmax.f32 %v971, 0.0
    %v984 = vmax.f32 %v972, 0.0
    %v985 = vmax.f32 %v973, 0.0
    %v986 = vmax.f32 %v974, 0.0
    %v987 = vmax.f32 %v975, 0.0
    %v988 = vmax.f32 %v976, 0.0
    %v989 = vmax.f32 %v977, 0.0
    %v990 = vmax.f32 %v978, 0.0
    %v991 = vmax.f32 %v979, 0.0
    %v992 = vmax.f32 %v980, 0.0
    %993 = vst [vmem:[#allocation2] sm:$0xff] %v981
    %994 = vst [vmem:[#allocation2 + $0x8] sm:$0xff] %v982
    %995 = vst [vmem:[#allocation2 + $0x10] sm:$0xff] %v983
    %996 = vst [vmem:[#allocation2 + $0x18] sm:$0xff] %v984
    %997 = vst [vmem:[#allocation2 + $0x20] sm:$0xff] %v985
    %998 = vst [vmem:[#allocation2 + $0x28] sm:$0xff] %v986
    %999 = vst [vmem:[#allocation2 + $0x30] sm:$0xff] %v987
    %1000 = vst [vmem:[#allocation2 + $0x38] sm:$0xff] %v988
    %1001 = vst [vmem:[#allocation2 + $0x40] sm:$0xff] %v989
    %1002 = vst [vmem:[#allocation2 + $0x48] sm:$0xff] %v990
    %1003 = vst [vmem:[#allocation2 + $0x50] sm:$0xff] %v991
    %1004 = vst [vmem:[#allocation2 + $0x58] sm:$0xff] %v992
    %v1005 = vld [vmem:[#allocation2] sm:$0xff]
    %v1006 = vld [vmem:[#allocation2 + $0x10] sm:$0xff]
    %v1007 = vld [vmem:[#allocation2 + $0x20] sm:$0xff]
    %v1008 = vld [vmem:[#allocation2 + $0x30] sm:$0xff]
    %s1009 = scalar_lea.vmem [#allocation2], 8
    %v1010 = vld [vmem:[%s1009] sm:$0xff]
    %v1011 = vld [vmem:[%s1009 + $0x10] sm:$0xff]
    %v1012 = vld [vmem:[%s1009 + $0x20] sm:$0xff]
    %v1013 = vld [vmem:[%s1009 + $0x30] sm:$0xff]
    %s1014 = scalar_lea.vmem [#allocation2], 16
    %v1015 = vld [vmem:[%s1014] sm:$0xff]
    %v1016 = vld [vmem:[%s1014 + $0x10] sm:$0xff]
    %v1017 = vld [vmem:[%s1014 + $0x20] sm:$0xff]
    %v1018 = vld [vmem:[%s1014 + $0x30] sm:$0xff]
    %s1019 = scalar_lea.vmem [#allocation2], 24
    %v1020 = vld [vmem:[%s1019] sm:$0xff]
    %v1021 = vld [vmem:[%s1019 + $0x10] sm:$0xff]
    %v1022 = vld [vmem:[%s1019 + $0x20] sm:$0xff]
    %v1023 = vld [vmem:[%s1019 + $0x30] sm:$0xff]
    %s1024 = scalar_lea.vmem [#allocation2], 32
    %v1025 = vld [vmem:[%s1024] sm:$0xff]
    %v1026 = vld [vmem:[%s1024 + $0x10] sm:$0xff]
    %v1027 = vld [vmem:[%s1024 + $0x20] sm:$0xff]
    %v1028 = vld [vmem:[%s1024 + $0x30] sm:$0xff]
    %v1029 = vpack.c.bf16 %v1006, %v1005
    %v1030 = vpack.c.bf16 %v1011, %v1010
    %v1031 = vpack.c.bf16 %v1016, %v1015
    %v1032 = vpack.c.bf16 %v1021, %v1020
    %v1033 = vpack.c.bf16 %v1026, %v1025
    %v1034 = vpack.c.bf16 %v1008, %v1007
    %v1035 = vpack.c.bf16 %v1013, %v1012
    %v1036 = vpack.c.bf16 %v1018, %v1017
    %v1037 = vpack.c.bf16 %v1023, %v1022
    %v1038 = vpack.c.bf16 %v1028, %v1027
    %v1039 = vld [vmem:[%s2] sm:$0xff]
    %v1040 = vld [vmem:[%s2 + $0x8] sm:$0xff]
    %v1041 = vld [vmem:[%s2 + $0x10] sm:$0xff]
    %v1042 = vld [vmem:[%s2 + $0x18] sm:$0xff]
    %v1043 = vld [vmem:[%s2 + $0x20] sm:$0xff]
    %v1044 = vld [vmem:[%s2 + $0x28] sm:$0xff]
    %v1045 = vld [vmem:[%s2 + $0x30] sm:$0xff]
    %v1046 = vld [vmem:[%s2 + $0x38] sm:$0xff]
    %v1047 = vld [vmem:[%s2 + $0x40] sm:$0xff]
    %v1048 = vld [vmem:[%s2 + $0x48] sm:$0xff]
    %v1049 = vld [vmem:[%s2 + $0x50] sm:$0xff]
    %v1050 = vld [vmem:[%s2 + $0x58] sm:$0xff]
    %v1051 = vld [vmem:[%s2 + $0x60] sm:$0xff]
    %v1052 = vld [vmem:[%s2 + $0x68] sm:$0xff]
    %v1053 = vld [vmem:[%s2 + $0x70] sm:$0xff]
    %v1054 = vld [vmem:[%s2 + $0x78] sm:$0xff]
    %v1055 = vld [vmem:[%s2 + $0x80] sm:$0xff]
    %v1056 = vld [vmem:[%s2 + $0x88] sm:$0xff]
    %v1057 = vld [vmem:[%s2 + $0x90] sm:$0xff]
    %v1058 = vld [vmem:[%s2 + $0x98] sm:$0xff]
    %v1059 = vld [vmem:[%s2 + $0xa0] sm:$0xff]
    %v1060 = vld [vmem:[%s2 + $0xa8] sm:$0xff]
    %v1061 = vld [vmem:[%s2 + $0xb0] sm:$0xff]
    %v1062 = vld [vmem:[%s2 + $0xb8] sm:$0xff]
    %v1063 = vld [vmem:[%s2 + $0xc0] sm:$0xff]
    %v1064 = vld [vmem:[%s2 + $0xc8] sm:$0xff]
    %v1065 = vld [vmem:[%s2 + $0xd0] sm:$0xff]
    %v1066 = vld [vmem:[%s2 + $0xd8] sm:$0xff]
    %v1067 = vld [vmem:[%s2 + $0xe0] sm:$0xff]
    %v1068 = vld [vmem:[%s2 + $0xe8] sm:$0xff]
    %v1069 = vld [vmem:[%s2 + $0xf0] sm:$0xff]
    %v1070 = vld [vmem:[%s2 + $0xf8] sm:$0xff]
    %v1071 = vld [vmem:[%s2 + $0x100] sm:$0xff]
    %v1072 = vld [vmem:[%s2 + $0x108] sm:$0xff]
    %v1073 = vld [vmem:[%s2 + $0x110] sm:$0xff]
    %v1074 = vld [vmem:[%s2 + $0x118] sm:$0xff]
    %v1075 = vld [vmem:[%s2 + $0x120] sm:$0xff]
    %v1076 = vld [vmem:[%s2 + $0x128] sm:$0xff]
    %v1077 = vld [vmem:[%s2 + $0x130] sm:$0xff]
    %v1078 = vld [vmem:[%s2 + $0x138] sm:$0xff]
    %v1079 = vld [vmem:[%s2 + $0x140] sm:$0xff]
    %v1080 = vld [vmem:[%s2 + $0x148] sm:$0xff]
    %v1081 = vld [vmem:[%s2 + $0x150] sm:$0xff]
    %v1082 = vld [vmem:[%s2 + $0x158] sm:$0xff]
    %v1083 = vld [vmem:[%s2 + $0x160] sm:$0xff]
    %v1084 = vld [vmem:[%s2 + $0x168] sm:$0xff]
    %v1085 = vld [vmem:[%s2 + $0x170] sm:$0xff]
    %v1086 = vld [vmem:[%s2 + $0x178] sm:$0xff]
    %v1087 = vld [vmem:[%s2 + $0x180] sm:$0xff]
    %v1088 = vld [vmem:[%s2 + $0x188] sm:$0xff]
    %v1089 = vld [vmem:[%s2 + $0x190] sm:$0xff]
    %v1090 = vld [vmem:[%s2 + $0x198] sm:$0xff]
    %v1091 = vld [vmem:[%s2 + $0x1a0] sm:$0xff]
    %v1092 = vld [vmem:[%s2 + $0x1a8] sm:$0xff]
    %v1093 = vld [vmem:[%s2 + $0x1b0] sm:$0xff]
    %v1094 = vld [vmem:[%s2 + $0x1b8] sm:$0xff]
    %v1095 = vld [vmem:[%s2 + $0x1c0] sm:$0xff]
    %v1096 = vld [vmem:[%s2 + $0x1c8] sm:$0xff]
    %v1097 = vld [vmem:[%s2 + $0x1d0] sm:$0xff]
    %v1098 = vld [vmem:[%s2 + $0x1d8] sm:$0xff]
    %v1099 = vld [vmem:[%s2 + $0x1e0] sm:$0xff]
    %v1100 = vld [vmem:[%s2 + $0x1e8] sm:$0xff]
    %v1101 = vld [vmem:[%s2 + $0x1f0] sm:$0xff]
    %v1102 = vld [vmem:[%s2 + $0x1f8] sm:$0xff]
    %v1103 = vld [vmem:[%s2 + $0x200] sm:$0xff]
    %v1104 = vld [vmem:[%s2 + $0x208] sm:$0xff]
    %v1105 = vld [vmem:[%s2 + $0x210] sm:$0xff]
    %v1106 = vld [vmem:[%s2 + $0x218] sm:$0xff]
    %v1107 = vld [vmem:[%s2 + $0x220] sm:$0xff]
    %v1108 = vld [vmem:[%s2 + $0x228] sm:$0xff]
    %v1109 = vld [vmem:[%s2 + $0x230] sm:$0xff]
    %v1110 = vld [vmem:[%s2 + $0x238] sm:$0xff]
    %v1111 = vld [vmem:[%s2 + $0x240] sm:$0xff]
    %v1112 = vld [vmem:[%s2 + $0x248] sm:$0xff]
    %v1113 = vld [vmem:[%s2 + $0x250] sm:$0xff]
    %v1114 = vld [vmem:[%s2 + $0x258] sm:$0xff]
    %v1115 = vld [vmem:[%s2 + $0x260] sm:$0xff]
    %v1116 = vld [vmem:[%s2 + $0x268] sm:$0xff]
    %v1117 = vld [vmem:[%s2 + $0x270] sm:$0xff]
    %v1118 = vld [vmem:[%s2 + $0x278] sm:$0xff]
    %v1199 = vunpack.c.l.b16 %v1039
    %v1200 = vunpack.c.h.b16 %v1039
    %v1201 = vunpack.c.l.b16 %v1040
    %v1202 = vunpack.c.h.b16 %v1040
    %v1203 = vunpack.c.l.b16 %v1041
    %v1204 = vunpack.c.h.b16 %v1041
    %v1205 = vunpack.c.l.b16 %v1042
    %v1206 = vunpack.c.h.b16 %v1042
    %v1207 = vunpack.c.l.b16 %v1043
    %v1208 = vunpack.c.h.b16 %v1043
    %v1209 = vunpack.c.l.b16 %v1044
    %v1210 = vunpack.c.h.b16 %v1044
    %v1211 = vunpack.c.l.b16 %v1045
    %v1212 = vunpack.c.h.b16 %v1045
    %v1213 = vunpack.c.l.b16 %v1046
    %v1214 = vunpack.c.h.b16 %v1046
    %v1215 = vunpack.c.l.b16 %v1047
    %v1216 = vunpack.c.h.b16 %v1047
    %v1217 = vunpack.c.l.b16 %v1048
    %v1218 = vunpack.c.h.b16 %v1048
    %v1219 = vunpack.c.l.b16 %v1049
    %v1220 = vunpack.c.h.b16 %v1049
    %v1221 = vunpack.c.l.b16 %v1050
    %v1222 = vunpack.c.h.b16 %v1050
    %v1223 = vunpack.c.l.b16 %v1051
    %v1224 = vunpack.c.h.b16 %v1051
    %v1225 = vunpack.c.l.b16 %v1052
    %v1226 = vunpack.c.h.b16 %v1052
    %v1227 = vunpack.c.l.b16 %v1053
    %v1228 = vunpack.c.h.b16 %v1053
    %v1229 = vunpack.c.l.b16 %v1054
    %v1230 = vunpack.c.h.b16 %v1054
    %v1231 = vunpack.c.l.b16 %v1055
    %v1232 = vunpack.c.h.b16 %v1055
    %v1233 = vunpack.c.l.b16 %v1056
    %v1234 = vunpack.c.h.b16 %v1056
    %v1235 = vunpack.c.l.b16 %v1057
    %v1236 = vunpack.c.h.b16 %v1057
    %v1237 = vunpack.c.l.b16 %v1058
    %v1238 = vunpack.c.h.b16 %v1058
    %v1239 = vunpack.c.l.b16 %v1059
    %v1240 = vunpack.c.h.b16 %v1059
    %v1241 = vunpack.c.l.b16 %v1060
    %v1242 = vunpack.c.h.b16 %v1060
    %v1243 = vunpack.c.l.b16 %v1061
    %v1244 = vunpack.c.h.b16 %v1061
    %v1245 = vunpack.c.l.b16 %v1062
    %v1246 = vunpack.c.h.b16 %v1062
    %v1247 = vunpack.c.l.b16 %v1063
    %v1248 = vunpack.c.h.b16 %v1063
    %v1249 = vunpack.c.l.b16 %v1064
    %v1250 = vunpack.c.h.b16 %v1064
    %v1251 = vunpack.c.l.b16 %v1065
    %v1252 = vunpack.c.h.b16 %v1065
    %v1253 = vunpack.c.l.b16 %v1066
    %v1254 = vunpack.c.h.b16 %v1066
    %v1255 = vunpack.c.l.b16 %v1067
    %v1256 = vunpack.c.h.b16 %v1067
    %v1257 = vunpack.c.l.b16 %v1068
    %v1258 = vunpack.c.h.b16 %v1068
    %v1259 = vunpack.c.l.b16 %v1069
    %v1260 = vunpack.c.h.b16 %v1069
    %v1261 = vunpack.c.l.b16 %v1070
    %v1262 = vunpack.c.h.b16 %v1070
    %v1263 = vunpack.c.l.b16 %v1071
    %v1264 = vunpack.c.h.b16 %v1071
    %v1265 = vunpack.c.l.b16 %v1072
    %v1266 = vunpack.c.h.b16 %v1072
    %v1267 = vunpack.c.l.b16 %v1073
    %v1268 = vunpack.c.h.b16 %v1073
    %v1269 = vunpack.c.l.b16 %v1074
    %v1270 = vunpack.c.h.b16 %v1074
    %v1271 = vunpack.c.l.b16 %v1075
    %v1272 = vunpack.c.h.b16 %v1075
    %v1273 = vunpack.c.l.b16 %v1076
    %v1274 = vunpack.c.h.b16 %v1076
    %v1275 = vunpack.c.l.b16 %v1077
    %v1276 = vunpack.c.h.b16 %v1077
    %v1277 = vunpack.c.l.b16 %v1078
    %v1278 = vunpack.c.h.b16 %v1078
    %v1279 = vunpack.c.l.b16 %v1079
    %v1280 = vunpack.c.h.b16 %v1079
    %v1281 = vunpack.c.l.b16 %v1080
    %v1282 = vunpack.c.h.b16 %v1080
    %v1283 = vunpack.c.l.b16 %v1081
    %v1284 = vunpack.c.h.b16 %v1081
    %v1285 = vunpack.c.l.b16 %v1082
    %v1286 = vunpack.c.h.b16 %v1082
    %v1287 = vunpack.c.l.b16 %v1083
    %v1288 = vunpack.c.h.b16 %v1083
    %v1289 = vunpack.c.l.b16 %v1084
    %v1290 = vunpack.c.h.b16 %v1084
    %v1291 = vunpack.c.l.b16 %v1085
    %v1292 = vunpack.c.h.b16 %v1085
    %v1293 = vunpack.c.l.b16 %v1086
    %v1294 = vunpack.c.h.b16 %v1086
    %v1295 = vunpack.c.l.b16 %v1087
    %v1296 = vunpack.c.h.b16 %v1087
    %v1297 = vunpack.c.l.b16 %v1088
    %v1298 = vunpack.c.h.b16 %v1088
    %v1299 = vunpack.c.l.b16 %v1089
    %v1300 = vunpack.c.h.b16 %v1089
    %v1301 = vunpack.c.l.b16 %v1090
    %v1302 = vunpack.c.h.b16 %v1090
    %v1303 = vunpack.c.l.b16 %v1091
    %v1304 = vunpack.c.h.b16 %v1091
    %v1305 = vunpack.c.l.b16 %v1092
    %v1306 = vunpack.c.h.b16 %v1092
    %v1307 = vunpack.c.l.b16 %v1093
    %v1308 = vunpack.c.h.b16 %v1093
    %v1309 = vunpack.c.l.b16 %v1094
    %v1310 = vunpack.c.h.b16 %v1094
    %v1311 = vunpack.c.l.b16 %v1095
    %v1312 = vunpack.c.h.b16 %v1095
    %v1313 = vunpack.c.l.b16 %v1096
    %v1314 = vunpack.c.h.b16 %v1096
    %v1315 = vunpack.c.l.b16 %v1097
    %v1316 = vunpack.c.h.b16 %v1097
    %v1317 = vunpack.c.l.b16 %v1098
    %v1318 = vunpack.c.h.b16 %v1098
    %v1319 = vunpack.c.l.b16 %v1099
    %v1320 = vunpack.c.h.b16 %v1099
    %v1321 = vunpack.c.l.b16 %v1100
    %v1322 = vunpack.c.h.b16 %v1100
    %v1323 = vunpack.c.l.b16 %v1101
    %v1324 = vunpack.c.h.b16 %v1101
    %v1325 = vunpack.c.l.b16 %v1102
    %v1326 = vunpack.c.h.b16 %v1102
    %v1327 = vunpack.c.l.b16 %v1103
    %v1328 = vunpack.c.h.b16 %v1103
    %v1329 = vunpack.c.l.b16 %v1104
    %v1330 = vunpack.c.h.b16 %v1104
    %v1331 = vunpack.c.l.b16 %v1105
    %v1332 = vunpack.c.h.b16 %v1105
    %v1333 = vunpack.c.l.b16 %v1106
    %v1334 = vunpack.c.h.b16 %v1106
    %v1335 = vunpack.c.l.b16 %v1107
    %v1336 = vunpack.c.h.b16 %v1107
    %v1337 = vunpack.c.l.b16 %v1108
    %v1338 = vunpack.c.h.b16 %v1108
    %v1339 = vunpack.c.l.b16 %v1109
    %v1340 = vunpack.c.h.b16 %v1109
    %v1341 = vunpack.c.l.b16 %v1110
    %v1342 = vunpack.c.h.b16 %v1110
    %v1343 = vunpack.c.l.b16 %v1111
    %v1344 = vunpack.c.h.b16 %v1111
    %v1345 = vunpack.c.l.b16 %v1112
    %v1346 = vunpack.c.h.b16 %v1112
    %v1347 = vunpack.c.l.b16 %v1113
    %v1348 = vunpack.c.h.b16 %v1113
    %v1349 = vunpack.c.l.b16 %v1114
    %v1350 = vunpack.c.h.b16 %v1114
    %v1351 = vunpack.c.l.b16 %v1115
    %v1352 = vunpack.c.h.b16 %v1115
    %v1353 = vunpack.c.l.b16 %v1116
    %v1354 = vunpack.c.h.b16 %v1116
    %v1355 = vunpack.c.l.b16 %v1117
    %v1356 = vunpack.c.h.b16 %v1117
    %v1357 = vunpack.c.l.b16 %v1118
    %v1358 = vunpack.c.h.b16 %v1118
    %v1359 = vpack.c.b16 %v1201, %v1199
    %v1360 = vpack.c.b16 %v1202, %v1200
    %v1361 = vpack.c.b16 %v1205, %v1203
    %v1362 = vpack.c.b16 %v1206, %v1204
    %v1363 = vpack.c.b16 %v1209, %v1207
    %v1364 = vpack.c.b16 %v1210, %v1208
    %v1365 = vpack.c.b16 %v1213, %v1211
    %v1366 = vpack.c.b16 %v1214, %v1212
    %v1367 = vpack.c.b16 %v1217, %v1215
    %v1368 = vpack.c.b16 %v1218, %v1216
    %v1369 = vpack.c.b16 %v1221, %v1219
    %v1370 = vpack.c.b16 %v1222, %v1220
    %v1371 = vpack.c.b16 %v1225, %v1223
    %v1372 = vpack.c.b16 %v1226, %v1224
    %v1373 = vpack.c.b16 %v1229, %v1227
    %v1374 = vpack.c.b16 %v1230, %v1228
    %v1375 = vpack.c.b16 %v1233, %v1231
    %v1376 = vpack.c.b16 %v1234, %v1232
    %v1377 = vpack.c.b16 %v1237, %v1235
    %v1378 = vpack.c.b16 %v1238, %v1236
    %v1379 = vpack.c.b16 %v1241, %v1239
    %v1380 = vpack.c.b16 %v1242, %v1240
    %v1381 = vpack.c.b16 %v1245, %v1243
    %v1382 = vpack.c.b16 %v1246, %v1244
    %v1383 = vpack.c.b16 %v1249, %v1247
    %v1384 = vpack.c.b16 %v1250, %v1248
    %v1385 = vpack.c.b16 %v1253, %v1251
    %v1386 = vpack.c.b16 %v1254, %v1252
    %v1387 = vpack.c.b16 %v1257, %v1255
    %v1388 = vpack.c.b16 %v1258, %v1256
    %v1389 = vpack.c.b16 %v1261, %v1259
    %v1390 = vpack.c.b16 %v1262, %v1260
    %v1391 = vpack.c.b16 %v1265, %v1263
    %v1392 = vpack.c.b16 %v1266, %v1264
    %v1393 = vpack.c.b16 %v1269, %v1267
    %v1394 = vpack.c.b16 %v1270, %v1268
    %v1395 = vpack.c.b16 %v1273, %v1271
    %v1396 = vpack.c.b16 %v1274, %v1272
    %v1397 = vpack.c.b16 %v1277, %v1275
    %v1398 = vpack.c.b16 %v1278, %v1276
    %v1399 = vpack.c.b16 %v1281, %v1279
    %v1400 = vpack.c.b16 %v1282, %v1280
    %v1401 = vpack.c.b16 %v1285, %v1283
    %v1402 = vpack.c.b16 %v1286, %v1284
    %v1403 = vpack.c.b16 %v1289, %v1287
    %v1404 = vpack.c.b16 %v1290, %v1288
    %v1405 = vpack.c.b16 %v1293, %v1291
    %v1406 = vpack.c.b16 %v1294, %v1292
    %v1407 = vpack.c.b16 %v1297, %v1295
    %v1408 = vpack.c.b16 %v1298, %v1296
    %v1409 = vpack.c.b16 %v1301, %v1299
    %v1410 = vpack.c.b16 %v1302, %v1300
    %v1411 = vpack.c.b16 %v1305, %v1303
    %v1412 = vpack.c.b16 %v1306, %v1304
    %v1413 = vpack.c.b16 %v1309, %v1307
    %v1414 = vpack.c.b16 %v1310, %v1308
    %v1415 = vpack.c.b16 %v1313, %v1311
    %v1416 = vpack.c.b16 %v1314, %v1312
    %v1417 = vpack.c.b16 %v1317, %v1315
    %v1418 = vpack.c.b16 %v1318, %v1316
    %v1419 = vpack.c.b16 %v1321, %v1319
    %v1420 = vpack.c.b16 %v1322, %v1320
    %v1421 = vpack.c.b16 %v1325, %v1323
    %v1422 = vpack.c.b16 %v1326, %v1324
    %v1423 = vpack.c.b16 %v1329, %v1327
    %v1424 = vpack.c.b16 %v1330, %v1328
    %v1425 = vpack.c.b16 %v1333, %v1331
    %v1426 = vpack.c.b16 %v1334, %v1332
    %v1427 = vpack.c.b16 %v1337, %v1335
    %v1428 = vpack.c.b16 %v1338, %v1336
    %v1429 = vpack.c.b16 %v1341, %v1339
    %v1430 = vpack.c.b16 %v1342, %v1340
    %v1431 = vpack.c.b16 %v1345, %v1343
    %v1432 = vpack.c.b16 %v1346, %v1344
    %v1433 = vpack.c.b16 %v1349, %v1347
    %v1434 = vpack.c.b16 %v1350, %v1348
    %v1435 = vpack.c.b16 %v1353, %v1351
    %v1436 = vpack.c.b16 %v1354, %v1352
    %v1437 = vpack.c.b16 %v1357, %v1355
    %v1438 = vpack.c.b16 %v1358, %v1356
    %1519 = vmatprep.subr.bf16.mxu0 %v1374
    %1520 = vmatpush1.bf16.msra.mxu0 %v1373
    %1521 = vmatprep.subr.bf16.mxu0 %v1372
    %1522 = vmatpush1.bf16.msra.mxu0 %v1371
    %1523 = vmatprep.subr.bf16.mxu0 %v1370
    %1524 = vmatpush1.bf16.msra.mxu0 %v1369
    %1525 = vmatprep.subr.bf16.mxu0 %v1368
    %1526 = vmatpush1.bf16.msra.mxu0 %v1367
    %1527 = vmatprep.subr.bf16.mxu0 %v1366
    %1528 = vmatpush1.bf16.msra.mxu0 %v1365
    %1529 = vmatprep.subr.bf16.mxu0 %v1364
    %1530 = vmatpush1.bf16.msra.mxu0 %v1363
    %1531 = vmatprep.subr.bf16.mxu0 %v1362
    %1532 = vmatpush1.bf16.msra.mxu0 %v1361
    %1533 = vmatprep.subr.bf16.mxu0 %v1360
    %1534 = vmatpush1.bf16.msra.mxu0 %v1359
    %1535 = vmatprep.subr.bf16.mxu0 %v1390
    %1536 = vmatpush2.bf16.msra.mxu0 %v1389
    %1537 = vmatprep.subr.bf16.mxu0 %v1388
    %1538 = vmatpush2.bf16.msra.mxu0 %v1387
    %1539 = vmatprep.subr.bf16.mxu0 %v1386
    %1540 = vmatpush2.bf16.msra.mxu0 %v1385
    %1541 = vmatprep.subr.bf16.mxu0 %v1384
    %1542 = vmatpush2.bf16.msra.mxu0 %v1383
    %1543 = vmatprep.subr.bf16.mxu0 %v1382
    %1544 = vmatpush2.bf16.msra.mxu0 %v1381
    %1545 = vmatprep.subr.bf16.mxu0 %v1380
    %1546 = vmatpush2.bf16.msra.mxu0 %v1379
    %1547 = vmatprep.subr.bf16.mxu0 %v1378
    %1548 = vmatpush2.bf16.msra.mxu0 %v1377
    %1549 = vmatprep.subr.bf16.mxu0 %v1376
    %1550 = vmatpush2.bf16.msra.mxu0 %v1375
    %1551 = vmatprep.mubr.bf16.mxu0 %v1030
    %1552 = vmatmul.mubr.bf16.gmra.mxu0 %v1029
    %v1553 = vpop.f32.mrf.mxu0
    %v1554 = vadd.f32 0.0, %v1553
    %v1555 = vpop.f32.mrf.mxu0
    %v1556 = vadd.f32 0.0, %v1555
    %v1557 = vpop.f32.mrf.mxu0
    %v1558 = vadd.f32 0.0, %v1557
    %v1559 = vpop.f32.mrf.mxu0
    %v1560 = vadd.f32 0.0, %v1559
    %1561 = vmatprep.mubr.bf16.mxu0 %v1035
    %1562 = vmatmul.mubr.bf16.gmra.mxu0 %v1034
    %v1563 = vpop.f32.mrf.mxu0
    %v1564 = vadd.f32 0.0, %v1563
    %v1565 = vpop.f32.mrf.mxu0
    %v1566 = vadd.f32 0.0, %v1565
    %v1567 = vpop.f32.mrf.mxu0
    %v1568 = vadd.f32 0.0, %v1567
    %v1569 = vpop.f32.mrf.mxu0
    %v1570 = vadd.f32 0.0, %v1569
    %1571 = vdwg.mxu0
    %1572 = vmatprep.subr.bf16.mxu0 %v1406
    %1573 = vmatpush1.bf16.msra.mxu0 %v1405
    %1574 = vmatprep.subr.bf16.mxu0 %v1404
    %1575 = vmatpush1.bf16.msra.mxu0 %v1403
    %1576 = vmatprep.subr.bf16.mxu0 %v1402
    %1577 = vmatpush1.bf16.msra.mxu0 %v1401
    %1578 = vmatprep.subr.bf16.mxu0 %v1400
    %1579 = vmatpush1.bf16.msra.mxu0 %v1399
    %1580 = vmatprep.subr.bf16.mxu0 %v1398
    %1581 = vmatpush1.bf16.msra.mxu0 %v1397
    %1582 = vmatprep.subr.bf16.mxu0 %v1396
    %1583 = vmatpush1.bf16.msra.mxu0 %v1395
    %1584 = vmatprep.subr.bf16.mxu0 %v1394
    %1585 = vmatpush1.bf16.msra.mxu0 %v1393
    %1586 = vmatprep.subr.bf16.mxu0 %v1392
    %1587 = vmatpush1.bf16.msra.mxu0 %v1391
    %1588 = vmatprep.subr.bf16.mxu0 %v1422
    %1589 = vmatpush2.bf16.msra.mxu0 %v1421
    %1590 = vmatprep.subr.bf16.mxu0 %v1420
    %1591 = vmatpush2.bf16.msra.mxu0 %v1419
    %1592 = vmatprep.subr.bf16.mxu0 %v1418
    %1593 = vmatpush2.bf16.msra.mxu0 %v1417
    %1594 = vmatprep.subr.bf16.mxu0 %v1416
    %1595 = vmatpush2.bf16.msra.mxu0 %v1415
    %1596 = vmatprep.subr.bf16.mxu0 %v1414
    %1597 = vmatpush2.bf16.msra.mxu0 %v1413
    %1598 = vmatprep.subr.bf16.mxu0 %v1412
    %1599 = vmatpush2.bf16.msra.mxu0 %v1411
    %1600 = vmatprep.subr.bf16.mxu0 %v1410
    %1601 = vmatpush2.bf16.msra.mxu0 %v1409
    %1602 = vmatprep.subr.bf16.mxu0 %v1408
    %1603 = vmatpush2.bf16.msra.mxu0 %v1407
    %1604 = vmatprep.mubr.bf16.mxu0 %v1032
    %1605 = vmatmul.mubr.bf16.gmra.mxu0 %v1031
    %v1606 = vpop.f32.mrf.mxu0
    %v1607 = vadd.f32 %v1554, %v1606
    %v1608 = vpop.f32.mrf.mxu0
    %v1609 = vadd.f32 %v1556, %v1608
    %v1610 = vpop.f32.mrf.mxu0
    %v1611 = vadd.f32 %v1558, %v1610
    %v1612 = vpop.f32.mrf.mxu0
    %v1613 = vadd.f32 %v1560, %v1612
    %1614 = vmatprep.mubr.bf16.mxu0 %v1037
    %1615 = vmatmul.mubr.bf16.gmra.mxu0 %v1036
    %v1616 = vpop.f32.mrf.mxu0
    %v1617 = vadd.f32 %v1564, %v1616
    %v1618 = vpop.f32.mrf.mxu0
    %v1619 = vadd.f32 %v1566, %v1618
    %v1620 = vpop.f32.mrf.mxu0
    %v1621 = vadd.f32 %v1568, %v1620
    %v1622 = vpop.f32.mrf.mxu0
    %v1623 = vadd.f32 %v1570, %v1622
    %1624 = vdwg.mxu0
    %1625 = vmatprep.subr.bf16.mxu0 %v1438
    %1626 = vmatpush1.bf16.msra.mxu0 %v1437
    %1627 = vmatprep.subr.bf16.mxu0 %v1436
    %1628 = vmatpush1.bf16.msra.mxu0 %v1435
    %1629 = vmatprep.subr.bf16.mxu0 %v1434
    %1630 = vmatpush1.bf16.msra.mxu0 %v1433
    %1631 = vmatprep.subr.bf16.mxu0 %v1432
    %1632 = vmatpush1.bf16.msra.mxu0 %v1431
    %1633 = vmatprep.subr.bf16.mxu0 %v1430
    %1634 = vmatpush1.bf16.msra.mxu0 %v1429
    %1635 = vmatprep.subr.bf16.mxu0 %v1428
    %1636 = vmatpush1.bf16.msra.mxu0 %v1427
    %1637 = vmatprep.subr.bf16.mxu0 %v1426
    %1638 = vmatpush1.bf16.msra.mxu0 %v1425
    %1639 = vmatprep.subr.bf16.mxu0 %v1424
    %1640 = vmatpush1.bf16.msra.mxu0 %v1423
    %1641 = vmatprep.subr.bf16.mxu0 0
    %1642 = vmatpush2.bf16.msra.mxu0 0
    %1643 = vmatprep.subr.bf16.mxu0 0
    %1644 = vmatpush2.bf16.msra.mxu0 0
    %1645 = vmatprep.subr.bf16.mxu0 0
    %1646 = vmatpush2.bf16.msra.mxu0 0
    %1647 = vmatprep.subr.bf16.mxu0 0
    %1648 = vmatpush2.bf16.msra.mxu0 0
    %1649 = vmatprep.subr.bf16.mxu0 0
    %1650 = vmatpush2.bf16.msra.mxu0 0
    %1651 = vmatprep.subr.bf16.mxu0 0
    %1652 = vmatpush2.bf16.msra.mxu0 0
    %1653 = vmatprep.subr.bf16.mxu0 0
    %1654 = vmatpush2.bf16.msra.mxu0 0
    %1655 = vmatprep.subr.bf16.mxu0 0
    %1656 = vmatpush2.bf16.msra.mxu0 0
    %1657 = vmatprep.mubr.bf16.mxu0 0
    %1658 = vmatmul.mubr.bf16.gmra.mxu0 %v1033
    %v1659 = vpop.f32.mrf.mxu0
    %v1660 = vadd.f32 %v1607, %v1659
    %v1661 = vpop.f32.mrf.mxu0
    %v1662 = vadd.f32 %v1609, %v1661
    %v1663 = vpop.f32.mrf.mxu0
    %v1664 = vadd.f32 %v1611, %v1663
    %v1665 = vpop.f32.mrf.mxu0
    %v1666 = vadd.f32 %v1613, %v1665
    %1667 = vmatprep.mubr.bf16.mxu0 0
    %1668 = vmatmul.mubr.bf16.gmra.mxu0 %v1038
    %v1669 = vpop.f32.mrf.mxu0
    %v1670 = vadd.f32 %v1617, %v1669
    %v1671 = vpop.f32.mrf.mxu0
    %v1672 = vadd.f32 %v1619, %v1671
    %v1673 = vpop.f32.mrf.mxu0
    %v1674 = vadd.f32 %v1621, %v1673
    %v1675 = vpop.f32.mrf.mxu0
    %v1676 = vadd.f32 %v1623, %v1675
    %1677 = vdwg.mxu0
    %s1678 = scalar_lea.vmem [#allocation2], 40
    %v1679 = vld [vmem:[%s1678] sm:$0xff]
    %v1680 = vld [vmem:[%s1678 + $0x10] sm:$0xff]
    %v1681 = vld [vmem:[%s1678 + $0x20] sm:$0xff]
    %v1682 = vld [vmem:[%s1678 + $0x30] sm:$0xff]
    %v1683 = vpack.c.bf16 %v1680, %v1679
    %v1684 = vpack.c.bf16 %v1682, %v1681
    %1685 = vmatprep.subr.bf16.mxu0 %v1374
    %1686 = vmatpush1.bf16.msra.mxu0 %v1373
    %1687 = vmatprep.subr.bf16.mxu0 %v1372
    %1688 = vmatpush1.bf16.msra.mxu0 %v1371
    %1689 = vmatprep.subr.bf16.mxu0 %v1370
    %1690 = vmatpush1.bf16.msra.mxu0 %v1369
    %1691 = vmatprep.subr.bf16.mxu0 %v1368
    %1692 = vmatpush1.bf16.msra.mxu0 %v1367
    %1693 = vmatprep.subr.bf16.mxu0 %v1366
    %1694 = vmatpush1.bf16.msra.mxu0 %v1365
    %1695 = vmatprep.subr.bf16.mxu0 %v1364
    %1696 = vmatpush1.bf16.msra.mxu0 %v1363
    %1697 = vmatprep.subr.bf16.mxu0 %v1362
    %1698 = vmatpush1.bf16.msra.mxu0 %v1361
    %1699 = vmatprep.subr.bf16.mxu0 %v1360
    %1700 = vmatpush1.bf16.msra.mxu0 %v1359
    %1701 = vmatprep.subr.bf16.mxu0 %v1390
    %1702 = vmatpush2.bf16.msra.mxu0 %v1389
    %1703 = vmatprep.subr.bf16.mxu0 %v1388
    %1704 = vmatpush2.bf16.msra.mxu0 %v1387
    %1705 = vmatprep.subr.bf16.mxu0 %v1386
    %1706 = vmatpush2.bf16.msra.mxu0 %v1385
    %1707 = vmatprep.subr.bf16.mxu0 %v1384
    %1708 = vmatpush2.bf16.msra.mxu0 %v1383
    %1709 = vmatprep.subr.bf16.mxu0 %v1382
    %1710 = vmatpush2.bf16.msra.mxu0 %v1381
    %1711 = vmatprep.subr.bf16.mxu0 %v1380
    %1712 = vmatpush2.bf16.msra.mxu0 %v1379
    %1713 = vmatprep.subr.bf16.mxu0 %v1378
    %1714 = vmatpush2.bf16.msra.mxu0 %v1377
    %1715 = vmatprep.subr.bf16.mxu0 %v1376
    %1716 = vmatpush2.bf16.msra.mxu0 %v1375
    %1717 = vmatprep.mubr.bf16.mxu0 %v1031
    %1718 = vmatmul.mubr.bf16.gmra.mxu0 %v1030
    %v1719 = vpop.f32.mrf.mxu0
    %v1720 = vadd.f32 0.0, %v1719
    %v1721 = vpop.f32.mrf.mxu0
    %v1722 = vadd.f32 0.0, %v1721
    %v1723 = vpop.f32.mrf.mxu0
    %v1724 = vadd.f32 0.0, %v1723
    %v1725 = vpop.f32.mrf.mxu0
    %v1726 = vadd.f32 0.0, %v1725
    %1727 = vmatprep.mubr.bf16.mxu0 %v1036
    %1728 = vmatmul.mubr.bf16.gmra.mxu0 %v1035
    %v1729 = vpop.f32.mrf.mxu0
    %v1730 = vadd.f32 0.0, %v1729
    %v1731 = vpop.f32.mrf.mxu0
    %v1732 = vadd.f32 0.0, %v1731
    %v1733 = vpop.f32.mrf.mxu0
    %v1734 = vadd.f32 0.0, %v1733
    %v1735 = vpop.f32.mrf.mxu0
    %v1736 = vadd.f32 0.0, %v1735
    %1737 = vdwg.mxu0
    %1738 = vmatprep.subr.bf16.mxu0 %v1406
    %1739 = vmatpush1.bf16.msra.mxu0 %v1405
    %1740 = vmatprep.subr.bf16.mxu0 %v1404
    %1741 = vmatpush1.bf16.msra.mxu0 %v1403
    %1742 = vmatprep.subr.bf16.mxu0 %v1402
    %1743 = vmatpush1.bf16.msra.mxu0 %v1401
    %1744 = vmatprep.subr.bf16.mxu0 %v1400
    %1745 = vmatpush1.bf16.msra.mxu0 %v1399
    %1746 = vmatprep.subr.bf16.mxu0 %v1398
    %1747 = vmatpush1.bf16.msra.mxu0 %v1397
    %1748 = vmatprep.subr.bf16.mxu0 %v1396
    %1749 = vmatpush1.bf16.msra.mxu0 %v1395
    %1750 = vmatprep.subr.bf16.mxu0 %v1394
    %1751 = vmatpush1.bf16.msra.mxu0 %v1393
    %1752 = vmatprep.subr.bf16.mxu0 %v1392
    %1753 = vmatpush1.bf16.msra.mxu0 %v1391
    %1754 = vmatprep.subr.bf16.mxu0 %v1422
    %1755 = vmatpush2.bf16.msra.mxu0 %v1421
    %1756 = vmatprep.subr.bf16.mxu0 %v1420
    %1757 = vmatpush2.bf16.msra.mxu0 %v1419
    %1758 = vmatprep.subr.bf16.mxu0 %v1418
    %1759 = vmatpush2.bf16.msra.mxu0 %v1417
    %1760 = vmatprep.subr.bf16.mxu0 %v1416
    %1761 = vmatpush2.bf16.msra.mxu0 %v1415
    %1762 = vmatprep.subr.bf16.mxu0 %v1414
    %1763 = vmatpush2.bf16.msra.mxu0 %v1413
    %1764 = vmatprep.subr.bf16.mxu0 %v1412
    %1765 = vmatpush2.bf16.msra.mxu0 %v1411
    %1766 = vmatprep.subr.bf16.mxu0 %v1410
    %1767 = vmatpush2.bf16.msra.mxu0 %v1409
    %1768 = vmatprep.subr.bf16.mxu0 %v1408
    %1769 = vmatpush2.bf16.msra.mxu0 %v1407
    %1770 = vmatprep.mubr.bf16.mxu0 %v1033
    %1771 = vmatmul.mubr.bf16.gmra.mxu0 %v1032
    %v1772 = vpop.f32.mrf.mxu0
    %v1773 = vadd.f32 %v1720, %v1772
    %v1774 = vpop.f32.mrf.mxu0
    %v1775 = vadd.f32 %v1722, %v1774
    %v1776 = vpop.f32.mrf.mxu0
    %v1777 = vadd.f32 %v1724, %v1776
    %v1778 = vpop.f32.mrf.mxu0
    %v1779 = vadd.f32 %v1726, %v1778
    %1780 = vmatprep.mubr.bf16.mxu0 %v1038
    %1781 = vmatmul.mubr.bf16.gmra.mxu0 %v1037
    %v1782 = vpop.f32.mrf.mxu0
    %v1783 = vadd.f32 %v1730, %v1782
    %v1784 = vpop.f32.mrf.mxu0
    %v1785 = vadd.f32 %v1732, %v1784
    %v1786 = vpop.f32.mrf.mxu0
    %v1787 = vadd.f32 %v1734, %v1786
    %v1788 = vpop.f32.mrf.mxu0
    %v1789 = vadd.f32 %v1736, %v1788
    %1790 = vdwg.mxu0
    %1791 = vmatprep.subr.bf16.mxu0 %v1438
    %1792 = vmatpush1.bf16.msra.mxu0 %v1437
    %1793 = vmatprep.subr.bf16.mxu0 %v1436
    %1794 = vmatpush1.bf16.msra.mxu0 %v1435
    %1795 = vmatprep.subr.bf16.mxu0 %v1434
    %1796 = vmatpush1.bf16.msra.mxu0 %v1433
    %1797 = vmatprep.subr.bf16.mxu0 %v1432
    %1798 = vmatpush1.bf16.msra.mxu0 %v1431
    %1799 = vmatprep.subr.bf16.mxu0 %v1430
    %1800 = vmatpush1.bf16.msra.mxu0 %v1429
    %1801 = vmatprep.subr.bf16.mxu0 %v1428
    %1802 = vmatpush1.bf16.msra.mxu0 %v1427
    %1803 = vmatprep.subr.bf16.mxu0 %v1426
    %1804 = vmatpush1.bf16.msra.mxu0 %v1425
    %1805 = vmatprep.subr.bf16.mxu0 %v1424
    %1806 = vmatpush1.bf16.msra.mxu0 %v1423
    %1807 = vmatprep.subr.bf16.mxu0 0
    %1808 = vmatpush2.bf16.msra.mxu0 0
    %1809 = vmatprep.subr.bf16.mxu0 0
    %1810 = vmatpush2.bf16.msra.mxu0 0
    %1811 = vmatprep.subr.bf16.mxu0 0
    %1812 = vmatpush2.bf16.msra.mxu0 0
    %1813 = vmatprep.subr.bf16.mxu0 0
    %1814 = vmatpush2.bf16.msra.mxu0 0
    %1815 = vmatprep.subr.bf16.mxu0 0
    %1816 = vmatpush2.bf16.msra.mxu0 0
    %1817 = vmatprep.subr.bf16.mxu0 0
    %1818 = vmatpush2.bf16.msra.mxu0 0
    %1819 = vmatprep.subr.bf16.mxu0 0
    %1820 = vmatpush2.bf16.msra.mxu0 0
    %1821 = vmatprep.subr.bf16.mxu0 0
    %1822 = vmatpush2.bf16.msra.mxu0 0
    %1823 = vmatprep.mubr.bf16.mxu0 0
    %1824 = vmatmul.mubr.bf16.gmra.mxu0 %v1683
    %v1825 = vpop.f32.mrf.mxu0
    %v1826 = vadd.f32 %v1773, %v1825
    %v1827 = vpop.f32.mrf.mxu0
    %v1828 = vadd.f32 %v1775, %v1827
    %v1829 = vpop.f32.mrf.mxu0
    %v1830 = vadd.f32 %v1777, %v1829
    %v1831 = vpop.f32.mrf.mxu0
    %v1832 = vadd.f32 %v1779, %v1831
    %1833 = vmatprep.mubr.bf16.mxu0 0
    %1834 = vmatmul.mubr.bf16.gmra.mxu0 %v1684
    %v1835 = vpop.f32.mrf.mxu0
    %v1836 = vadd.f32 %v1783, %v1835
    %v1837 = vpop.f32.mrf.mxu0
    %v1838 = vadd.f32 %v1785, %v1837
    %v1839 = vpop.f32.mrf.mxu0
    %v1840 = vadd.f32 %v1787, %v1839
    %v1841 = vpop.f32.mrf.mxu0
    %v1842 = vadd.f32 %v1789, %v1841
    %1843 = vdwg.mxu0
    %v1844 = vmax.f32 %v1660, %v1826
    %v1845 = vmax.f32 %v1662, %v1828
    %v1846 = vmax.f32 %v1664, %v1830
    %v1847 = vmax.f32 %v1666, %v1832
    %v1848 = vmax.f32 %v1670, %v1836
    %v1849 = vmax.f32 %v1672, %v1838
    %v1850 = vmax.f32 %v1674, %v1840
    %v1851 = vmax.f32 %v1676, %v1842
    %v1852 = vmax.f32 %v1844, %v1845
    %v1853 = vmax.f32 %v1846, %v1847
    %v1854 = vmax.f32 %v1848, %v1849
    %v1855 = vmax.f32 %v1850, %v1851
    %v1856 = vld [vmem:[%s4] sm:$0x1]
    %v1858 = vlaneseq
    %v1859 = vshrl.u32 %v1858, 7
    %v1860 = vsub.s32 0, %v1859
    %v1861 = vrot.slane %v1856, %v1860
    %v1863 = vadd.f32 %v1852, %v1861
    %v1864 = vadd.f32 %v1853, %v1861
    %v1865 = vadd.f32 %v1854, %v1861
    %v1866 = vadd.f32 %v1855, %v1861
    %v1867 = vmax.f32 %v1863, 0.0
    %v1868 = vmax.f32 %v1864, 0.0
    %v1869 = vmax.f32 %v1865, 0.0
    %v1870 = vmax.f32 %v1866, 0.0
    %v1871 = vpack.c.bf16 %v1867, %v1867
    %v1872 = vpack.c.bf16 %v1868, %v1868
    %v1873 = vpack.c.bf16 %v1869, %v1869
    %v1874 = vpack.c.bf16 %v1870, %v1870
    %v1875 = vld [vmem:[%s5] sm:$0xf]
    %v1876 = vld [vmem:[%s5 + $0x4] sm:$0xf]
    %v1877 = vld [vmem:[%s5 + $0x8] sm:$0xf]
    %v1878 = vld [vmem:[%s5 + $0xc] sm:$0xf]
    %v1879 = vld [vmem:[%s5 + $0x10] sm:$0xf]
    %v1880 = vld [vmem:[%s5 + $0x14] sm:$0xf]
    %v1881 = vld [vmem:[%s5 + $0x18] sm:$0xf]
    %v1882 = vld [vmem:[%s5 + $0x1c] sm:$0xf]
    %v1883 = vld [vmem:[%s5 + $0x20] sm:$0xf]
    %v1884 = vld [vmem:[%s5 + $0x24] sm:$0xf]
    %v1885 = vld [vmem:[%s5 + $0x28] sm:$0xf]
    %v1886 = vld [vmem:[%s5 + $0x2c] sm:$0xf]
    %v1887 = vld [vmem:[%s5 + $0x30] sm:$0xf]
    %v1888 = vld [vmem:[%s5 + $0x34] sm:$0xf]
    %v1889 = vld [vmem:[%s5 + $0x38] sm:$0xf]
    %v1890 = vld [vmem:[%s5 + $0x3c] sm:$0xf]
    %v1891 = vld [vmem:[%s5 + $0x40] sm:$0xf]
    %v1892 = vld [vmem:[%s5 + $0x44] sm:$0xf]
    %v1893 = vld [vmem:[%s5 + $0x48] sm:$0xf]
    %v1894 = vld [vmem:[%s5 + $0x4c] sm:$0xf]
    %v1895 = vld [vmem:[%s5 + $0x50] sm:$0xf]
    %v1896 = vld [vmem:[%s5 + $0x54] sm:$0xf]
    %v1897 = vld [vmem:[%s5 + $0x58] sm:$0xf]
    %v1898 = vld [vmem:[%s5 + $0x5c] sm:$0xf]
    %v1899 = vld [vmem:[%s5 + $0x60] sm:$0xf]
    %v1900 = vld [vmem:[%s5 + $0x64] sm:$0xf]
    %v1901 = vld [vmem:[%s5 + $0x68] sm:$0xf]
    %v1902 = vld [vmem:[%s5 + $0x6c] sm:$0xf]
    %v1903 = vld [vmem:[%s5 + $0x70] sm:$0xf]
    %v1904 = vld [vmem:[%s5 + $0x74] sm:$0xf]
    %v1905 = vld [vmem:[%s5 + $0x78] sm:$0xf]
    %v1906 = vld [vmem:[%s5 + $0x7c] sm:$0xf]
    %v1907 = vld [vmem:[%s5 + $0x80] sm:$0xf]
    %v1908 = vld [vmem:[%s5 + $0x84] sm:$0xf]
    %v1909 = vld [vmem:[%s5 + $0x88] sm:$0xf]
    %v1910 = vld [vmem:[%s5 + $0x8c] sm:$0xf]
    %v1911 = vld [vmem:[%s5 + $0x90] sm:$0xf]
    %v1912 = vld [vmem:[%s5 + $0x94] sm:$0xf]
    %v1913 = vld [vmem:[%s5 + $0x98] sm:$0xf]
    %v1914 = vld [vmem:[%s5 + $0x9c] sm:$0xf]
    %v1915 = vld [vmem:[%s5 + $0xa0] sm:$0xf]
    %v1916 = vld [vmem:[%s5 + $0xa4] sm:$0xf]
    %v1917 = vld [vmem:[%s5 + $0xa8] sm:$0xf]
    %v1918 = vld [vmem:[%s5 + $0xac] sm:$0xf]
    %v1919 = vld [vmem:[%s5 + $0xb0] sm:$0xf]
    %v1920 = vld [vmem:[%s5 + $0xb4] sm:$0xf]
    %v1921 = vld [vmem:[%s5 + $0xb8] sm:$0xf]
    %v1922 = vld [vmem:[%s5 + $0xbc] sm:$0xf]
    %v1923 = vld [vmem:[%s5 + $0xc0] sm:$0xf]
    %v1924 = vld [vmem:[%s5 + $0xc4] sm:$0xf]
    %v1925 = vld [vmem:[%s5 + $0xc8] sm:$0xf]
    %v1926 = vld [vmem:[%s5 + $0xcc] sm:$0xf]
    %v1927 = vld [vmem:[%s5 + $0xd0] sm:$0xf]
    %v1928 = vld [vmem:[%s5 + $0xd4] sm:$0xf]
    %v1929 = vld [vmem:[%s5 + $0xd8] sm:$0xf]
    %v1930 = vld [vmem:[%s5 + $0xdc] sm:$0xf]
    %v1931 = vld [vmem:[%s5 + $0xe0] sm:$0xf]
    %v1932 = vld [vmem:[%s5 + $0xe4] sm:$0xf]
    %v1933 = vld [vmem:[%s5 + $0xe8] sm:$0xf]
    %v1934 = vld [vmem:[%s5 + $0xec] sm:$0xf]
    %v1935 = vld [vmem:[%s5 + $0xf0] sm:$0xf]
    %v1936 = vld [vmem:[%s5 + $0xf4] sm:$0xf]
    %v1937 = vld [vmem:[%s5 + $0xf8] sm:$0xf]
    %v1938 = vld [vmem:[%s5 + $0xfc] sm:$0xf]
    %v1939 = vld [vmem:[%s6] sm:$0x1]
    %v1941 = vlaneseq
    %v1942 = vshrl.u32 %v1941, 7
    %v1943 = vsub.s32 0, %v1942
    %v1944 = vrot.slane %v1939, %v1943
    %v2010 = vunpack.c.l.b16 %v1875
    %v2011 = vunpack.c.l.b16 %v1876
    %v2012 = vunpack.c.l.b16 %v1877
    %v2013 = vunpack.c.l.b16 %v1878
    %v2014 = vunpack.c.l.b16 %v1879
    %v2015 = vunpack.c.l.b16 %v1880
    %v2016 = vunpack.c.l.b16 %v1881
    %v2017 = vunpack.c.l.b16 %v1882
    %v2018 = vunpack.c.l.b16 %v1883
    %v2019 = vunpack.c.l.b16 %v1884
    %v2020 = vunpack.c.l.b16 %v1885
    %v2021 = vunpack.c.l.b16 %v1886
    %v2022 = vunpack.c.l.b16 %v1887
    %v2023 = vunpack.c.l.b16 %v1888
    %v2024 = vunpack.c.l.b16 %v1889
    %v2025 = vunpack.c.l.b16 %v1890
    %v2026 = vunpack.c.l.b16 %v1891
    %v2027 = vunpack.c.l.b16 %v1892
    %v2028 = vunpack.c.l.b16 %v1893
    %v2029 = vunpack.c.l.b16 %v1894
    %v2030 = vunpack.c.l.b16 %v1895
    %v2031 = vunpack.c.l.b16 %v1896
    %v2032 = vunpack.c.l.b16 %v1897
    %v2033 = vunpack.c.l.b16 %v1898
    %v2034 = vunpack.c.l.b16 %v1899
    %v2035 = vunpack.c.l.b16 %v1900
    %v2036 = vunpack.c.l.b16 %v1901
    %v2037 = vunpack.c.l.b16 %v1902
    %v2038 = vunpack.c.l.b16 %v1903
    %v2039 = vunpack.c.l.b16 %v1904
    %v2040 = vunpack.c.l.b16 %v1905
    %v2041 = vunpack.c.l.b16 %v1906
    %v2042 = vunpack.c.l.b16 %v1907
    %v2043 = vunpack.c.l.b16 %v1908
    %v2044 = vunpack.c.l.b16 %v1909
    %v2045 = vunpack.c.l.b16 %v1910
    %v2046 = vunpack.c.l.b16 %v1911
    %v2047 = vunpack.c.l.b16 %v1912
    %v2048 = vunpack.c.l.b16 %v1913
    %v2049 = vunpack.c.l.b16 %v1914
    %v2050 = vunpack.c.l.b16 %v1915
    %v2051 = vunpack.c.l.b16 %v1916
    %v2052 = vunpack.c.l.b16 %v1917
    %v2053 = vunpack.c.l.b16 %v1918
    %v2054 = vunpack.c.l.b16 %v1919
    %v2055 = vunpack.c.l.b16 %v1920
    %v2056 = vunpack.c.l.b16 %v1921
    %v2057 = vunpack.c.l.b16 %v1922
    %v2058 = vunpack.c.l.b16 %v1923
    %v2059 = vunpack.c.l.b16 %v1924
    %v2060 = vunpack.c.l.b16 %v1925
    %v2061 = vunpack.c.l.b16 %v1926
    %v2062 = vunpack.c.l.b16 %v1927
    %v2063 = vunpack.c.l.b16 %v1928
    %v2064 = vunpack.c.l.b16 %v1929
    %v2065 = vunpack.c.l.b16 %v1930
    %v2066 = vunpack.c.l.b16 %v1931
    %v2067 = vunpack.c.l.b16 %v1932
    %v2068 = vunpack.c.l.b16 %v1933
    %v2069 = vunpack.c.l.b16 %v1934
    %v2070 = vunpack.c.l.b16 %v1935
    %v2071 = vunpack.c.l.b16 %v1936
    %v2072 = vunpack.c.l.b16 %v1937
    %v2073 = vunpack.c.l.b16 %v1938
    %v2074 = vpack.c.b16 %v2011, %v2010
    %v2075 = vpack.c.b16 %v2013, %v2012
    %v2076 = vpack.c.b16 %v2015, %v2014
    %v2077 = vpack.c.b16 %v2017, %v2016
    %v2078 = vpack.c.b16 %v2019, %v2018
    %v2079 = vpack.c.b16 %v2021, %v2020
    %v2080 = vpack.c.b16 %v2023, %v2022
    %v2081 = vpack.c.b16 %v2025, %v2024
    %v2082 = vpack.c.b16 %v2027, %v2026
    %v2083 = vpack.c.b16 %v2029, %v2028
    %v2084 = vpack.c.b16 %v2031, %v2030
    %v2085 = vpack.c.b16 %v2033, %v2032
    %v2086 = vpack.c.b16 %v2035, %v2034
    %v2087 = vpack.c.b16 %v2037, %v2036
    %v2088 = vpack.c.b16 %v2039, %v2038
    %v2089 = vpack.c.b16 %v2041, %v2040
    %v2090 = vpack.c.b16 %v2043, %v2042
    %v2091 = vpack.c.b16 %v2045, %v2044
    %v2092 = vpack.c.b16 %v2047, %v2046
    %v2093 = vpack.c.b16 %v2049, %v2048
    %v2094 = vpack.c.b16 %v2051, %v2050
    %v2095 = vpack.c.b16 %v2053, %v2052
    %v2096 = vpack.c.b16 %v2055, %v2054
    %v2097 = vpack.c.b16 %v2057, %v2056
    %v2098 = vpack.c.b16 %v2059, %v2058
    %v2099 = vpack.c.b16 %v2061, %v2060
    %v2100 = vpack.c.b16 %v2063, %v2062
    %v2101 = vpack.c.b16 %v2065, %v2064
    %v2102 = vpack.c.b16 %v2067, %v2066
    %v2103 = vpack.c.b16 %v2069, %v2068
    %v2104 = vpack.c.b16 %v2071, %v2070
    %v2105 = vpack.c.b16 %v2073, %v2072
    %2138 = vmatprep.subr.bf16.mxu0 0
    %2139 = vmatpush1.bf16.msra.mxu0 %v2081
    %2140 = vmatprep.subr.bf16.mxu0 0
    %2141 = vmatpush1.bf16.msra.mxu0 %v2080
    %2142 = vmatprep.subr.bf16.mxu0 0
    %2143 = vmatpush1.bf16.msra.mxu0 %v2079
    %2144 = vmatprep.subr.bf16.mxu0 0
    %2145 = vmatpush1.bf16.msra.mxu0 %v2078
    %2146 = vmatprep.subr.bf16.mxu0 0
    %2147 = vmatpush1.bf16.msra.mxu0 %v2077
    %2148 = vmatprep.subr.bf16.mxu0 0
    %2149 = vmatpush1.bf16.msra.mxu0 %v2076
    %2150 = vmatprep.subr.bf16.mxu0 0
    %2151 = vmatpush1.bf16.msra.mxu0 %v2075
    %2152 = vmatprep.subr.bf16.mxu0 0
    %2153 = vmatpush1.bf16.msra.mxu0 %v2074
    %2154 = vmatprep.subr.bf16.mxu0 0
    %2155 = vmatpush2.bf16.msra.mxu0 %v2089
    %2156 = vmatprep.subr.bf16.mxu0 0
    %2157 = vmatpush2.bf16.msra.mxu0 %v2088
    %2158 = vmatprep.subr.bf16.mxu0 0
    %2159 = vmatpush2.bf16.msra.mxu0 %v2087
    %2160 = vmatprep.subr.bf16.mxu0 0
    %2161 = vmatpush2.bf16.msra.mxu0 %v2086
    %2162 = vmatprep.subr.bf16.mxu0 0
    %2163 = vmatpush2.bf16.msra.mxu0 %v2085
    %2164 = vmatprep.subr.bf16.mxu0 0
    %2165 = vmatpush2.bf16.msra.mxu0 %v2084
    %2166 = vmatprep.subr.bf16.mxu0 0
    %2167 = vmatpush2.bf16.msra.mxu0 %v2083
    %2168 = vmatprep.subr.bf16.mxu0 0
    %2169 = vmatpush2.bf16.msra.mxu0 %v2082
    %2170 = vmatprep.mubr.bf16.mxu0 %v1872
    %2171 = vmatmul.mubr.bf16.gmra.mxu0 %v1871
    %v2172 = vpop.f32.mrf.mxu0
    %v2173 = vadd.f32 %v1944, %v2172
    %v2174 = vpop.f32.mrf.mxu0
    %v2175 = vpop.f32.mrf.mxu0
    %v2176 = vpop.f32.mrf.mxu0
    %2177 = vdwg.mxu0
    %2178 = vmatprep.subr.bf16.mxu0 0
    %2179 = vmatpush1.bf16.msra.mxu0 %v2097
    %2180 = vmatprep.subr.bf16.mxu0 0
    %2181 = vmatpush1.bf16.msra.mxu0 %v2096
    %2182 = vmatprep.subr.bf16.mxu0 0
    %2183 = vmatpush1.bf16.msra.mxu0 %v2095
    %2184 = vmatprep.subr.bf16.mxu0 0
    %2185 = vmatpush1.bf16.msra.mxu0 %v2094
    %2186 = vmatprep.subr.bf16.mxu0 0
    %2187 = vmatpush1.bf16.msra.mxu0 %v2093
    %2188 = vmatprep.subr.bf16.mxu0 0
    %2189 = vmatpush1.bf16.msra.mxu0 %v2092
    %2190 = vmatprep.subr.bf16.mxu0 0
    %2191 = vmatpush1.bf16.msra.mxu0 %v2091
    %2192 = vmatprep.subr.bf16.mxu0 0
    %2193 = vmatpush1.bf16.msra.mxu0 %v2090
    %2194 = vmatprep.subr.bf16.mxu0 0
    %2195 = vmatpush2.bf16.msra.mxu0 %v2105
    %2196 = vmatprep.subr.bf16.mxu0 0
    %2197 = vmatpush2.bf16.msra.mxu0 %v2104
    %2198 = vmatprep.subr.bf16.mxu0 0
    %2199 = vmatpush2.bf16.msra.mxu0 %v2103
    %2200 = vmatprep.subr.bf16.mxu0 0
    %2201 = vmatpush2.bf16.msra.mxu0 %v2102
    %2202 = vmatprep.subr.bf16.mxu0 0
    %2203 = vmatpush2.bf16.msra.mxu0 %v2101
    %2204 = vmatprep.subr.bf16.mxu0 0
    %2205 = vmatpush2.bf16.msra.mxu0 %v2100
    %2206 = vmatprep.subr.bf16.mxu0 0
    %2207 = vmatpush2.bf16.msra.mxu0 %v2099
    %2208 = vmatprep.subr.bf16.mxu0 0
    %2209 = vmatpush2.bf16.msra.mxu0 %v2098
    %2210 = vmatprep.mubr.bf16.mxu0 %v1874
    %2211 = vmatmul.mubr.bf16.gmra.mxu0 %v1873
    %v2212 = vpop.f32.mrf.mxu0
    %v2213 = vadd.f32 %v2173, %v2212
    %v2214 = vpop.f32.mrf.mxu0
    %v2215 = vpop.f32.mrf.mxu0
    %v2216 = vpop.f32.mrf.mxu0
    %2217 = vdwg.mxu0
    %vm2218 = vcmask 80896
    %v2219 = vsel %vm2218, %v2213, -inf
    %2220 = vmax.xlane.f32.xlu0 %v2219
    %v2221 = vpop.xlane.xlu0 %2220
    %v2222 = vsub.f32 %v2213, %v2221
    %v2223 = vmul.f32 %v2222, 1.442695
    %v2224 = vpow.pop %v2223
    %v2225 = vsel %vm2218, %v2224, 0.0
    %2226 = vadd.xlane.f32.xlu0 %v2225
    %v2227 = vpop.xlane.xlu0 %2226
    %v2228 = vlog2.pop %v2227
    %v2229 = vmul.f32 %v2228, 0.6931472
    %v2230 = vsub.f32 %v2222, %v2229
    %2231 = vst.msk [vmem:[%s7] sm:$0xff] %vm2218, %v2230
    // Predicated region
    $region34: #{net_forward.1} parent=1 // pred_check
      _
    $region35: #{net_forward.1} parent=1 // pred_check_branch
      %2233 = sbr.rel (0) target = $region37
    $region36: #{net_forward.1} parent=1 // pred_region
      _
    $region37: #{net_forward.1} parent=1 // pred_fallthru
      _
    // Predicated region
    $region38: #{net_forward.1} parent=1 // pred_check
      _
    $region39: #{net_forward.1} parent=1 // pred_check_branch
      %2235 = sbr.rel (0) target = $region41
    $region40: #{net_forward.1} parent=1 // pred_region
      _
    $region41: #{net_forward.1} parent=1 // pred_fallthru
      _
    %2236 = vsyncpa [#allocation4], 1

</llo_original>
